<compile_context>
chip_gen: v7x
topology: tpu7x:2x2x1
jax: 0.10.0
libtpu: 0.0.40
codegen_flags: <defaults>
</compile_context>

<pallas_src>
import functools
import math

import jax
import jax.numpy as jnp
from jax import lax
from jax.experimental import pallas as pl
from jax.experimental.pallas import tpu as pltpu


def _cdiv(a, b):
    return -(-a // b)


def _round_up(x, m):
    return _cdiv(x, m) * m


def _ocr_ptr_kernel(q_ref, k_ref, wq_ref, bq_ref, wk_ref, bk_ref, mask_ref,
                    out_ref, qproj_ref, *, bb, tq, tkt, h, d, use_bf16):
    """One grid step = one (batch block, key tile) pair.

    q_ref     : (bb, tq, h)    query rows of this batch block (resident across
                               the key-tile axis)
    k_ref     : (bb, tkt, h)   key rows of this key tile
    wq_ref    : (h, d)         1/sqrt(d) folded in by the wrapper (bf16 or f32)
    bq_ref    : (1, d)         f32 (scaled)
    wk_ref    : (h, d)
    bk_ref    : (1, d)
    mask_ref  : (bb, 1, tkt)   additive mask slice
    out_ref   : (bb, tq, tkt)  scores
    qproj_ref : (bb, tq, d)    VMEM scratch: cached query projection
    """
    j = pl.program_id(1)

    # Project the queries once per batch block (key tile 0) and cache them.
    @pl.when(j == 0)
    def _():
        q = q_ref[...].reshape(bb * tq, h)
        if use_bf16:
            q = q.astype(jnp.bfloat16)
        qp = jnp.dot(q, wq_ref[...], preferred_element_type=jnp.float32)
        qp = qp + bq_ref[...]
        qproj_ref[...] = qp.reshape(bb, tq, d).astype(qproj_ref.dtype)

    # Project this key tile (all bb*tkt rows in one MXU matmul).
    k = k_ref[...].reshape(bb * tkt, h)
    if use_bf16:
        k = k.astype(jnp.bfloat16)
    kp = jnp.dot(k, wk_ref[...], preferred_element_type=jnp.float32)
    kp = kp + bk_ref[...]
    kp = kp.reshape(bb, tkt, d)
    if use_bf16:
        kp = kp.astype(jnp.bfloat16)

    # Batched NT contraction (no materialized k_proj transpose), f32 accum.
    s = jnp.einsum("bqd,bkd->bqk", qproj_ref[...], kp,
                   preferred_element_type=jnp.float32)
    s = s + mask_ref[...]                      # broadcast over the query axis
    out_ref[...] = s.astype(out_ref.dtype)     # one dense store per step


def _block_bytes(bb, tkt, *, tq, h, d, use_bf16, out_itemsize):
    """Approximate per-grid-step VMEM footprint (bytes) for sizing bb/tk_tile."""
    a = 2 if use_bf16 else 4     # activation / matmul-input bytes
    w = 2 if use_bf16 else 4     # weight bytes
    q_in = bb * tq * h * 4
    k_in = bb * tkt * h * 4
    m_in = bb * tkt * 4
    o_out = bb * tq * tkt * out_itemsize
    pipelined = 2 * (q_in + k_in + m_in + o_out)         # double-buffered blocks
    weights = 2 * h * d * w + 2 * d * 4                  # wq, wk (+ biases)
    scratch = bb * tq * d * a                            # cached q_proj
    temps = (bb * tq * h * a + bb * tkt * h * a          # casted activations
             + bb * tkt * d * (4 + a)                    # k_proj f32 (+cast)
             + bb * tq * d * 4                           # q_proj f32 pre-cast
             + bb * tq * tkt * 4)                        # f32 scores
    return pipelined + weights + scratch + temps


def ocr_ptr_net(query_inputs, key_inputs, attention_mask, params, *,
                use_bf16=True, out_dtype=jnp.float32,
                vmem_budget_bytes=36 * 1024 * 1024):
    """JAX/Pallas equivalent of OcrPtrNet.forward.

    out_dtype may be set to jnp.bfloat16 when the downstream softmax accepts
    it (halves score store traffic, biggest win on v5e).
    """
    wq, bq, wk, bk = params["wq"], params["bq"], params["wk"], params["bk"]
    H, D = wq.shape
    assert attention_mask.ndim == 2

    squeeze_result = query_inputs.ndim == 2
    if squeeze_result:
        query_inputs = query_inputs[:, None, :]           # (B, 1, H)

    B, Tq, _ = query_inputs.shape
    Tk = key_inputs.shape[1]

    # Fold 1/sqrt(D) into the query projection and cast weights ONCE here
    # (jit folds the cast); biases stay f32 (added to the f32 accumulator).
    inv = 1.0 / math.sqrt(D)
    w_dtype = jnp.bfloat16 if use_bf16 else jnp.float32
    wq_s = (wq.astype(jnp.float32) * inv).astype(w_dtype)
    wk_c = wk.astype(w_dtype)
    bq_s = (bq.astype(jnp.float32) * inv).reshape(1, D)
    bk_r = bk.astype(jnp.float32).reshape(1, D)

    out_itemsize = 2 if out_dtype == jnp.bfloat16 else 4
    bytes_fn = functools.partial(_block_bytes, tq=Tq, h=H, d=D,
                                 use_bf16=use_bf16, out_itemsize=out_itemsize)

    # ---- key padding / key-tile selection ----------------------------------
    tk8 = _round_up(Tk, 8)
    tk128 = _round_up(Tk, 128)
    # Lane-dense output only when the key padding overhead is modest;
    # otherwise pad Tk to the sublane multiple only (no 8x key-DMA inflation).
    tk_full = tk128 if tk128 <= max(tk8 + 64, (tk8 * 5) // 4) else tk8

    if tk_full <= 128 or bytes_fn(1, tk_full) <= vmem_budget_bytes:
        tk_tile, tk_pad, n_ktiles = tk_full, tk_full, 1
    else:
        tk_tile = 128
        while (tk_tile + 128 < tk_full
               and bytes_fn(1, tk_tile + 128) <= vmem_budget_bytes):
            tk_tile += 128
        tk_pad = _round_up(Tk, tk_tile)
        n_ktiles = tk_pad // tk_tile

    # ---- batch-block selection (VMEM budget, ~256 MXU rows target) ---------
    bb_rows_target = max(1, _cdiv(256, max(Tq, 1)))
    bb_cap = min(B, bb_rows_target)
    bb = 1
    while bb < bb_cap and bytes_fn(bb + 1, tk_tile) <= vmem_budget_bytes:
        bb += 1
    # Keep several grid steps so BlockSpec pipelining can hide DMA and the
    # v7x megacore has work on both TensorCores.
    min_steps = 4
    if _cdiv(B, bb) * n_ktiles < min_steps:
        bb = max(1, min(bb, (B * n_ktiles) // min_steps))

    n_blocks = _cdiv(B, bb)
    b_pad = n_blocks * bb

    # ---- host-side padding only when actually needed ------------------------
    qry = query_inputs
    key = key_inputs
    mask = attention_mask.reshape(B, 1, Tk)
    if b_pad != B:
        qry = jnp.pad(qry, ((0, b_pad - B), (0, 0), (0, 0)))
    if b_pad != B or tk_pad != Tk:
        key = jnp.pad(key, ((0, b_pad - B), (0, tk_pad - Tk), (0, 0)))
        mask = jnp.pad(mask, ((0, b_pad - B), (0, 0), (0, tk_pad - Tk)))

    scr_dtype = jnp.bfloat16 if use_bf16 else jnp.float32
    kernel = functools.partial(_ocr_ptr_kernel, bb=bb, tq=Tq, tkt=tk_tile,
                               h=H, d=D, use_bf16=use_bf16)

    fp = bytes_fn(bb, tk_tile)
    vmem_limit = int(min(max(int(fp * 1.3) + (4 << 20), 24 << 20), 56 << 20))

    def _call(weights_single_buffered):
        if weights_single_buffered:
            # Constant-index weights/biases: single buffer (no point double-
            # buffering blocks that never change across the grid).
            def const_spec(shape):
                return pl.BlockSpec(shape, lambda b, j: (0,) * len(shape),
                                    pipeline_mode=pl.Buffered(1))
        else:
            def const_spec(shape):
                return pl.BlockSpec(shape, lambda b, j: (0,) * len(shape))

        return pl.pallas_call(
            kernel,
            out_shape=jax.ShapeDtypeStruct((b_pad, Tq, tk_pad), out_dtype),
            grid_spec=pltpu.PrefetchScalarGridSpec(
                num_scalar_prefetch=0,
                grid=(n_blocks, n_ktiles),
                in_specs=[
                    pl.BlockSpec((bb, Tq, H), lambda b, j: (b, 0, 0)),      # q
                    pl.BlockSpec((bb, tk_tile, H), lambda b, j: (b, j, 0)),  # k
                    const_spec((H, D)),                                      # wq
                    const_spec((1, D)),                                      # bq
                    const_spec((H, D)),                                      # wk
                    const_spec((1, D)),                                      # bk
                    pl.BlockSpec((bb, 1, tk_tile), lambda b, j: (b, 0, j)),  # mask
                ],
                out_specs=pl.BlockSpec((bb, Tq, tk_tile),
                                       lambda b, j: (b, 0, j)),
                scratch_shapes=[pltpu.VMEM((bb, Tq, D), scr_dtype)],
            ),
            compiler_params=pltpu.CompilerParams(
                dimension_semantics=("parallel", "arbitrary"),
                vmem_limit_bytes=vmem_limit),
        )(qry, key, wq_s, bq_s, wk_c, bk_r, mask)

    try:
        out = jax.block_until_ready(_call(True))
    except Exception:
        # Fallback if pipeline_mode=pl.Buffered(1) is unavailable/rejected.
        out = _call(False)

    # TODO(synk): add a query-sequence tile axis for very long Tq; current
    # blocks tile batch and keys only.
    if b_pad != B or tk_pad != Tk:
        out = out[:B, :, :Tk]
    if squeeze_result:
        out = out[:, 0, :]
    return out


def init_params(key, hidden_size, query_key_size=None):
    """Init matching nn.Linear(hidden_size, query_key_size) x2.

    PyTorch nn.Linear stores weight as (out, in) and computes x @ W^T + b; we
    store the transposed weight (in, out) so the kernel does x @ W + b.
    """
    if query_key_size is None:
        query_key_size = hidden_size
    k1, k2, k3, k4 = jax.random.split(key, 4)
    bound = 1.0 / math.sqrt(hidden_size)
    wq = jax.random.uniform(k1, (hidden_size, query_key_size),
                            jnp.float32, -bound, bound)
    bq = jax.random.uniform(k2, (query_key_size,), jnp.float32, -bound, bound)
    wk = jax.random.uniform(k3, (hidden_size, query_key_size),
                            jnp.float32, -bound, bound)
    bk = jax.random.uniform(k4, (query_key_size,), jnp.float32, -bound, bound)
    return {"wq": wq, "bq": bq, "wk": wk, "bk": bk}


def _reference(query_inputs, key_inputs, attention_mask, params,
               use_bf16=False):
    """Pure-JAX reference mirroring the PyTorch forward (optionally emulating
    the kernel's bf16 matmul-input rounding for tight comparison)."""
    wq, bq, wk, bk = params["wq"], params["bq"], params["wk"], params["bk"]
    D = wq.shape[1]
    squeeze_result = query_inputs.ndim == 2
    if squeeze_result:
        query_inputs = query_inputs[:, None, :]
    if use_bf16:
        inv = 1.0 / math.sqrt(D)
        q = query_inputs.astype(jnp.bfloat16)
        k = key_inputs.astype(jnp.bfloat16)
        wq_c = (wq * inv).astype(jnp.bfloat16)
        wk_c = wk.astype(jnp.bfloat16)
        ql = jnp.einsum("bqh,hd->bqd", q, wq_c,
                        preferred_element_type=jnp.float32) + bq * inv
        kl = jnp.einsum("bkh,hd->bkd", k, wk_c,
                        preferred_element_type=jnp.float32) + bk
        scores = jnp.einsum("bqd,bkd->bqk",
                            ql.astype(jnp.bfloat16), kl.astype(jnp.bfloat16),
                            preferred_element_type=jnp.float32)
    else:
        hp = lax.Precision.HIGHEST
        ql = jnp.einsum("bqh,hd->bqd", query_inputs, wq, precision=hp) + bq
        kl = jnp.einsum("bkh,hd->bkd", key_inputs, wk, precision=hp) + bk
        scores = jnp.einsum("bqd,bkd->bqk", ql, kl,
                            precision=hp) / math.sqrt(D)
    scores = scores + attention_mask[:, None, :]
    if squeeze_result:
        scores = scores[:, 0, :]
    return scores


if __name__ == "__main__":
    B, Tq, Tk, H = 2, 8, 16, 32   # small shapes consistent with the module

    key = jax.random.PRNGKey(0)
    kparam, kq, kk, km = jax.random.split(key, 4)

    params = init_params(kparam, hidden_size=H)        # query_key_size = H

    query_inputs = jax.random.normal(kq, (B, Tq, H), jnp.float32)
    key_inputs = jax.random.normal(kk, (B, Tk, H), jnp.float32)
    # additive attention mask: 0 where valid, -10000 where masked
    mask_bits = jax.random.bernoulli(km, 0.8, (B, Tk))
    attention_mask = jnp.where(mask_bits, 0.0, -10000.0).astype(jnp.float32)

    # 3-D query path, bf16 MXU inputs (default fast path)
    scores_bf16 = jax.block_until_ready(
        ocr_ptr_net(query_inputs, key_inputs, attention_mask, params))
    ref_bf16 = _reference(query_inputs, key_inputs, attention_mask, params,
                          use_bf16=True)
    assert scores_bf16.shape == (B, Tq, Tk)
    assert jnp.allclose(scores_bf16, ref_bf16, atol=1e-2, rtol=1e-2)

    # 3-D query path, f32 matmuls
    scores_f32 = jax.block_until_ready(
        ocr_ptr_net(query_inputs, key_inputs, attention_mask, params,
                    use_bf16=False))
    ref_f32 = _reference(query_inputs, key_inputs, attention_mask, params)
    assert jnp.allclose(scores_f32, ref_f32, atol=1e-2, rtol=1e-2)

    # 2-D query path (single decoding step, squeeze_result=True branch)
    q2d = query_inputs[:, 0, :]
    scores2 = jax.block_until_ready(
        ocr_ptr_net(q2d, key_inputs, attention_mask, params))
    ref2 = _reference(q2d, key_inputs, attention_mask, params, use_bf16=True)
    assert scores2.shape == (B, Tk)
    assert jnp.allclose(scores2, ref2, atol=1e-2, rtol=1e-2)

    print("KERNEL_OK")
</pallas_src>

<mosaic_0001>
module attributes {stable_mosaic.version = 11 : i64} {
  func.func @_ocr_ptr_kernel(%arg0: i32, %arg1: i32, %arg2: memref<1x8x32xf32, #tpu.memory_space<vmem>>, %arg3: memref<1x16x32xf32, #tpu.memory_space<vmem>>, %arg4: memref<32x32xbf16, #tpu.memory_space<vmem>>, %arg5: memref<1x32xf32, #tpu.memory_space<vmem>>, %arg6: memref<32x32xbf16, #tpu.memory_space<vmem>>, %arg7: memref<1x32xf32, #tpu.memory_space<vmem>>, %arg8: memref<1x1x16xf32, #tpu.memory_space<vmem>>, %arg9: memref<1x8x16xf32, #tpu.memory_space<vmem>>, %arg10: memref<1x8x32xbf16, #tpu.memory_space<vmem>>) attributes {dimension_semantics = [#tpu.dimension_semantics<parallel>, #tpu.dimension_semantics<arbitrary>], iteration_bounds = array<i64: 2, 1>, scalar_prefetch = 0 : i64, scratch_operands = 1 : i64, tpu.core_type = #tpu.core_type<tc>, window_params = [{transform_indices = @transform_0, window_bounds = array<i64: 1, 8, 32>}, {transform_indices = @transform_1, window_bounds = array<i64: 1, 16, 32>}, {pipeline_mode = #tpu.pipeline_mode<synchronous>, transform_indices = @transform_2, window_bounds = array<i64: 32, 32>}, {pipeline_mode = #tpu.pipeline_mode<synchronous>, transform_indices = @transform_3, window_bounds = array<i64: 1, 32>}, {pipeline_mode = #tpu.pipeline_mode<synchronous>, transform_indices = @transform_4, window_bounds = array<i64: 32, 32>}, {pipeline_mode = #tpu.pipeline_mode<synchronous>, transform_indices = @transform_5, window_bounds = array<i64: 1, 32>}, {transform_indices = @transform_6, window_bounds = array<i64: 1, 1, 16>}, {transform_indices = @transform_7, window_bounds = array<i64: 1, 8, 16>}]} {
    %c0_i32 = arith.constant 0 : i32
    %0 = arith.cmpi eq, %arg1, %c0_i32 : i32
    %1 = arith.extui %0 : i1 to i32
    %c0_i32_0 = arith.constant 0 : i32
    %2 = arith.cmpi ne, %1, %c0_i32_0 : i32
    scf.if %2 {
      %c0_17 = arith.constant 0 : index
      %c0_18 = arith.constant 0 : index
      %c0_19 = arith.constant 0 : index
      %19 = vector.load %arg2[%c0_17, %c0_18, %c0_19] : memref<1x8x32xf32, #tpu.memory_space<vmem>>, vector<1x8x32xf32>
      %20 = vector.shape_cast %19 : vector<1x8x32xf32> to vector<8x32xf32>
      %21 = arith.truncf %20 : vector<8x32xf32> to vector<8x32xbf16>
      %c0_20 = arith.constant 0 : index
      %c0_21 = arith.constant 0 : index
      %22 = vector.load %arg4[%c0_20, %c0_21] : memref<32x32xbf16, #tpu.memory_space<vmem>>, vector<32x32xbf16>
      %cst_22 = arith.constant dense<0.000000e+00> : vector<8x32xf32>
      %23 = tpu.matmul %21, %22, %cst_22 {dimension_numbers = #tpu.dot_dimension_numbers<[1], [0], [0], [1], [0, 0, 1, 1], [], []>} : vector<8x32xbf16>, vector<32x32xbf16>, vector<8x32xf32> -> vector<8x32xf32>
      %c0_23 = arith.constant 0 : index
      %c0_24 = arith.constant 0 : index
      %24 = vector.load %arg5[%c0_23, %c0_24] : memref<1x32xf32, #tpu.memory_space<vmem>>, vector<1x32xf32>
      %25 = vector.broadcast %24 : vector<1x32xf32> to vector<8x32xf32>
      %26 = arith.addf %23, %25 : vector<8x32xf32>
      %27 = vector.shape_cast %26 : vector<8x32xf32> to vector<1x8x32xf32>
      %28 = arith.truncf %27 : vector<1x8x32xf32> to vector<1x8x32xbf16>
      %c0_25 = arith.constant 0 : index
      %c0_26 = arith.constant 0 : index
      %c0_27 = arith.constant 0 : index
      %29 = vector.load %arg10[%c0_25, %c0_26, %c0_27] : memref<1x8x32xbf16, #tpu.memory_space<vmem>>, vector<1x8x32xbf16>
      tpu.vector_store %arg10[%c0_25, %c0_26, %c0_27], %28 {strides = array<i32>} : memref<1x8x32xbf16, #tpu.memory_space<vmem>>, vector<1x8x32xbf16>,
    } else {
    }
    %c0 = arith.constant 0 : index
    %c0_1 = arith.constant 0 : index
    %c0_2 = arith.constant 0 : index
    %3 = vector.load %arg3[%c0, %c0_1, %c0_2] : memref<1x16x32xf32, #tpu.memory_space<vmem>>, vector<1x16x32xf32>
    %4 = vector.shape_cast %3 : vector<1x16x32xf32> to vector<16x32xf32>
    %5 = arith.truncf %4 : vector<16x32xf32> to vector<16x32xbf16>
    %c0_3 = arith.constant 0 : index
    %c0_4 = arith.constant 0 : index
    %6 = vector.load %arg6[%c0_3, %c0_4] : memref<32x32xbf16, #tpu.memory_space<vmem>>, vector<32x32xbf16>
    %cst = arith.constant dense<0.000000e+00> : vector<16x32xf32>
    %7 = tpu.matmul %5, %6, %cst {dimension_numbers = #tpu.dot_dimension_numbers<[1], [0], [0], [1], [0, 0, 1, 1], [], []>} : vector<16x32xbf16>, vector<32x32xbf16>, vector<16x32xf32> -> vector<16x32xf32>
    %c0_5 = arith.constant 0 : index
    %c0_6 = arith.constant 0 : index
    %8 = vector.load %arg7[%c0_5, %c0_6] : memref<1x32xf32, #tpu.memory_space<vmem>>, vector<1x32xf32>
    %9 = vector.broadcast %8 : vector<1x32xf32> to vector<16x32xf32>
    %10 = arith.addf %7, %9 : vector<16x32xf32>
    %11 = vector.shape_cast %10 : vector<16x32xf32> to vector<1x16x32xf32>
    %12 = arith.truncf %11 : vector<1x16x32xf32> to vector<1x16x32xbf16>
    %c0_7 = arith.constant 0 : index
    %c0_8 = arith.constant 0 : index
    %c0_9 = arith.constant 0 : index
    %13 = vector.load %arg10[%c0_7, %c0_8, %c0_9] : memref<1x8x32xbf16, #tpu.memory_space<vmem>>, vector<1x8x32xbf16>
    "tpu.trace_start"() <{level = 10 : i32, message = "bqd,bkd->bqk"}> : () -> ()
    %cst_10 = arith.constant dense<0.000000e+00> : vector<1x8x16xf32>
    %14 = tpu.matmul %13, %12, %cst_10 {dimension_numbers = #tpu.dot_dimension_numbers<[2], [2], [1], [1], [0, 0, 0, 1, 1, 1], [0], [0]>} : vector<1x8x32xbf16>, vector<1x16x32xbf16>, vector<1x8x16xf32> -> vector<1x8x16xf32>
    "tpu.trace_stop"() : () -> ()
    %c0_11 = arith.constant 0 : index
    %c0_12 = arith.constant 0 : index
    %c0_13 = arith.constant 0 : index
    %15 = vector.load %arg8[%c0_11, %c0_12, %c0_13] : memref<1x1x16xf32, #tpu.memory_space<vmem>>, vector<1x1x16xf32>
    %16 = vector.broadcast %15 : vector<1x1x16xf32> to vector<1x8x16xf32>
    %17 = arith.addf %14, %16 : vector<1x8x16xf32>
    %c0_14 = arith.constant 0 : index
    %c0_15 = arith.constant 0 : index
    %c0_16 = arith.constant 0 : index
    %18 = vector.load %arg9[%c0_14, %c0_15, %c0_16] : memref<1x8x16xf32, #tpu.memory_space<vmem>>, vector<1x8x16xf32>
    tpu.vector_store %arg9[%c0_14, %c0_15, %c0_16], %17 {strides = array<i32>} : memref<1x8x16xf32, #tpu.memory_space<vmem>>, vector<1x8x16xf32>,
    return
  }
  func.func @transform_0(%arg0: i32, %arg1: i32) -> (i32, i32, i32) {
    %c0_i32 = arith.constant 0 : i32
    %c0_i32_0 = arith.constant 0 : i32
    %c0_i32_1 = arith.constant 0 : i32
    return %arg0, %c0_i32, %c0_i32_0 : i32, i32, i32
  }
  func.func @transform_1(%arg0: i32, %arg1: i32) -> (i32, i32, i32) {
    %c0_i32 = arith.constant 0 : i32
    %c0_i32_0 = arith.constant 0 : i32
    return %arg0, %arg1, %c0_i32 : i32, i32, i32
  }
  func.func @transform_2(%arg0: i32, %arg1: i32) -> (i32, i32) {
    %c0_i32 = arith.constant 0 : i32
    %c0_i32_0 = arith.constant 0 : i32
    %c0_i32_1 = arith.constant 0 : i32
    return %c0_i32, %c0_i32_0 : i32, i32
  }
  func.func @transform_3(%arg0: i32, %arg1: i32) -> (i32, i32) {
    %c0_i32 = arith.constant 0 : i32
    %c0_i32_0 = arith.constant 0 : i32
    %c0_i32_1 = arith.constant 0 : i32
    return %c0_i32, %c0_i32_0 : i32, i32
  }
  func.func @transform_4(%arg0: i32, %arg1: i32) -> (i32, i32) {
    %c0_i32 = arith.constant 0 : i32
    %c0_i32_0 = arith.constant 0 : i32
    %c0_i32_1 = arith.constant 0 : i32
    return %c0_i32, %c0_i32_0 : i32, i32
  }
  func.func @transform_5(%arg0: i32, %arg1: i32) -> (i32, i32) {
    %c0_i32 = arith.constant 0 : i32
    %c0_i32_0 = arith.constant 0 : i32
    %c0_i32_1 = arith.constant 0 : i32
    return %c0_i32, %c0_i32_0 : i32, i32
  }
  func.func @transform_6(%arg0: i32, %arg1: i32) -> (i32, i32, i32) {
    %c0_i32 = arith.constant 0 : i32
    %c0_i32_0 = arith.constant 0 : i32
    return %arg0, %c0_i32, %arg1 : i32, i32, i32
  }
  func.func @transform_7(%arg0: i32, %arg1: i32) -> (i32, i32, i32) {
    %c0_i32 = arith.constant 0 : i32
    %c0_i32_0 = arith.constant 0 : i32
    return %arg0, %c0_i32, %arg1 : i32, i32, i32
  }
}

module attributes {stable_mosaic.version = 11 : i64} {
  func.func @_ocr_ptr_kernel(%arg0: i32, %arg1: i32, %arg2: memref<1x8x32xf32, #tpu.memory_space<vmem>>, %arg3: memref<1x16x32xf32, #tpu.memory_space<vmem>>, %arg4: memref<32x32xbf16, #tpu.memory_space<vmem>>, %arg5: memref<1x32xf32, #tpu.memory_space<vmem>>, %arg6: memref<32x32xbf16, #tpu.memory_space<vmem>>, %arg7: memref<1x32xf32, #tpu.memory_space<vmem>>, %arg8: memref<1x1x16xf32, #tpu.memory_space<vmem>>, %arg9: memref<1x8x16xf32, #tpu.memory_space<vmem>>, %arg10: memref<1x8x32xbf16, #tpu.memory_space<vmem>>) attributes {dimension_semantics = [#tpu.dimension_semantics<parallel>, #tpu.dimension_semantics<arbitrary>], iteration_bounds = array<i64: 2, 1>, scalar_prefetch = 0 : i64, scratch_operands = 1 : i64, tpu.core_type = #tpu.core_type<tc>, window_params = [{transform_indices = @transform_0, window_bounds = array<i64: 1, 8, 32>}, {transform_indices = @transform_1, window_bounds = array<i64: 1, 16, 32>}, {pipeline_mode = #tpu.pipeline_mode<synchronous>, transform_indices = @transform_2, window_bounds = array<i64: 32, 32>}, {pipeline_mode = #tpu.pipeline_mode<synchronous>, transform_indices = @transform_3, window_bounds = array<i64: 1, 32>}, {pipeline_mode = #tpu.pipeline_mode<synchronous>, transform_indices = @transform_4, window_bounds = array<i64: 32, 32>}, {pipeline_mode = #tpu.pipeline_mode<synchronous>, transform_indices = @transform_5, window_bounds = array<i64: 1, 32>}, {transform_indices = @transform_6, window_bounds = array<i64: 1, 1, 16>}, {transform_indices = @transform_7, window_bounds = array<i64: 1, 8, 16>}]} {
    %c0_i32 = arith.constant 0 : i32
    %0 = arith.cmpi eq, %arg1, %c0_i32 : i32
    %1 = arith.extui %0 : i1 to i32
    %c0_i32_0 = arith.constant 0 : i32
    %2 = arith.cmpi ne, %1, %c0_i32_0 : i32
    scf.if %2 {
      %c0_17 = arith.constant 0 : index
      %c0_18 = arith.constant 0 : index
      %c0_19 = arith.constant 0 : index
      %19 = vector.load %arg2[%c0_17, %c0_18, %c0_19] : memref<1x8x32xf32, #tpu.memory_space<vmem>>, vector<1x8x32xf32>
      %20 = vector.shape_cast %19 : vector<1x8x32xf32> to vector<8x32xf32>
      %21 = arith.truncf %20 : vector<8x32xf32> to vector<8x32xbf16>
      %c0_20 = arith.constant 0 : index
      %c0_21 = arith.constant 0 : index
      %22 = vector.load %arg4[%c0_20, %c0_21] : memref<32x32xbf16, #tpu.memory_space<vmem>>, vector<32x32xbf16>
      %cst_22 = arith.constant dense<0.000000e+00> : vector<8x32xf32>
      %23 = tpu.matmul %21, %22, %cst_22 {dimension_numbers = #tpu.dot_dimension_numbers<[1], [0], [0], [1], [0, 0, 1, 1], [], []>} : vector<8x32xbf16>, vector<32x32xbf16>, vector<8x32xf32> -> vector<8x32xf32>
      %c0_23 = arith.constant 0 : index
      %c0_24 = arith.constant 0 : index
      %24 = vector.load %arg5[%c0_23, %c0_24] : memref<1x32xf32, #tpu.memory_space<vmem>>, vector<1x32xf32>
      %25 = vector.broadcast %24 : vector<1x32xf32> to vector<8x32xf32>
      %26 = arith.addf %23, %25 : vector<8x32xf32>
      %27 = vector.shape_cast %26 : vector<8x32xf32> to vector<1x8x32xf32>
      %28 = arith.truncf %27 : vector<1x8x32xf32> to vector<1x8x32xbf16>
      %c0_25 = arith.constant 0 : index
      %c0_26 = arith.constant 0 : index
      %c0_27 = arith.constant 0 : index
      %29 = vector.load %arg10[%c0_25, %c0_26, %c0_27] : memref<1x8x32xbf16, #tpu.memory_space<vmem>>, vector<1x8x32xbf16>
      tpu.vector_store %arg10[%c0_25, %c0_26, %c0_27], %28 {strides = array<i32>} : memref<1x8x32xbf16, #tpu.memory_space<vmem>>, vector<1x8x32xbf16>,
    } else {
    }
    %c0 = arith.constant 0 : index
    %c0_1 = arith.constant 0 : index
    %c0_2 = arith.constant 0 : index
    %3 = vector.load %arg3[%c0, %c0_1, %c0_2] : memref<1x16x32xf32, #tpu.memory_space<vmem>>, vector<1x16x32xf32>
    %4 = vector.shape_cast %3 : vector<1x16x32xf32> to vector<16x32xf32>
    %5 = arith.truncf %4 : vector<16x32xf32> to vector<16x32xbf16>
    %c0_3 = arith.constant 0 : index
    %c0_4 = arith.constant 0 : index
    %6 = vector.load %arg6[%c0_3, %c0_4] : memref<32x32xbf16, #tpu.memory_space<vmem>>, vector<32x32xbf16>
    %cst = arith.constant dense<0.000000e+00> : vector<16x32xf32>
    %7 = tpu.matmul %5, %6, %cst {dimension_numbers = #tpu.dot_dimension_numbers<[1], [0], [0], [1], [0, 0, 1, 1], [], []>} : vector<16x32xbf16>, vector<32x32xbf16>, vector<16x32xf32> -> vector<16x32xf32>
    %c0_5 = arith.constant 0 : index
    %c0_6 = arith.constant 0 : index
    %8 = vector.load %arg7[%c0_5, %c0_6] : memref<1x32xf32, #tpu.memory_space<vmem>>, vector<1x32xf32>
    %9 = vector.broadcast %8 : vector<1x32xf32> to vector<16x32xf32>
    %10 = arith.addf %7, %9 : vector<16x32xf32>
    %11 = vector.shape_cast %10 : vector<16x32xf32> to vector<1x16x32xf32>
    %12 = arith.truncf %11 : vector<1x16x32xf32> to vector<1x16x32xbf16>
    %c0_7 = arith.constant 0 : index
    %c0_8 = arith.constant 0 : index
    %c0_9 = arith.constant 0 : index
    %13 = vector.load %arg10[%c0_7, %c0_8, %c0_9] : memref<1x8x32xbf16, #tpu.memory_space<vmem>>, vector<1x8x32xbf16>
    "tpu.trace_start"() <{level = 10 : i32, message = "bqd,bkd->bqk"}> : () -> ()
    %cst_10 = arith.constant dense<0.000000e+00> : vector<1x8x16xf32>
    %14 = tpu.matmul %13, %12, %cst_10 {dimension_numbers = #tpu.dot_dimension_numbers<[2], [2], [1], [1], [0, 0, 0, 1, 1, 1], [0], [0]>} : vector<1x8x32xbf16>, vector<1x16x32xbf16>, vector<1x8x16xf32> -> vector<1x8x16xf32>
    "tpu.trace_stop"() : () -> ()
    %c0_11 = arith.constant 0 : index
    %c0_12 = arith.constant 0 : index
    %c0_13 = arith.constant 0 : index
    %15 = vector.load %arg8[%c0_11, %c0_12, %c0_13] : memref<1x1x16xf32, #tpu.memory_space<vmem>>, vector<1x1x16xf32>
    %16 = vector.broadcast %15 : vector<1x1x16xf32> to vector<1x8x16xf32>
    %17 = arith.addf %14, %16 : vector<1x8x16xf32>
    %c0_14 = arith.constant 0 : index
    %c0_15 = arith.constant 0 : index
    %c0_16 = arith.constant 0 : index
    %18 = vector.load %arg9[%c0_14, %c0_15, %c0_16] : memref<1x8x16xf32, #tpu.memory_space<vmem>>, vector<1x8x16xf32>
    tpu.vector_store %arg9[%c0_14, %c0_15, %c0_16], %17 {strides = array<i32>} : memref<1x8x16xf32, #tpu.memory_space<vmem>>, vector<1x8x16xf32>,
    return
  }
  func.func @transform_0(%arg0: i32, %arg1: i32) -> (i32, i32, i32) {
    %c0_i32 = arith.constant 0 : i32
    %c0_i32_0 = arith.constant 0 : i32
    %c0_i32_1 = arith.constant 0 : i32
    return %arg0, %c0_i32, %c0_i32_0 : i32, i32, i32
  }
  func.func @transform_1(%arg0: i32, %arg1: i32) -> (i32, i32, i32) {
    %c0_i32 = arith.constant 0 : i32
    %c0_i32_0 = arith.constant 0 : i32
    return %arg0, %arg1, %c0_i32 : i32, i32, i32
  }
  func.func @transform_2(%arg0: i32, %arg1: i32) -> (i32, i32) {
    %c0_i32 = arith.constant 0 : i32
    %c0_i32_0 = arith.constant 0 : i32
    %c0_i32_1 = arith.constant 0 : i32
    return %c0_i32, %c0_i32_0 : i32, i32
  }
  func.func @transform_3(%arg0: i32, %arg1: i32) -> (i32, i32) {
    %c0_i32 = arith.constant 0 : i32
    %c0_i32_0 = arith.constant 0 : i32
    %c0_i32_1 = arith.constant 0 : i32
    return %c0_i32, %c0_i32_0 : i32, i32
  }
  func.func @transform_4(%arg0: i32, %arg1: i32) -> (i32, i32) {
    %c0_i32 = arith.constant 0 : i32
    %c0_i32_0 = arith.constant 0 : i32
    %c0_i32_1 = arith.constant 0 : i32
    return %c0_i32, %c0_i32_0 : i32, i32
  }
  func.func @transform_5(%arg0: i32, %arg1: i32) -> (i32, i32) {
    %c0_i32 = arith.constant 0 : i32
    %c0_i32_0 = arith.constant 0 : i32
    %c0_i32_1 = arith.constant 0 : i32
    return %c0_i32, %c0_i32_0 : i32, i32
  }
  func.func @transform_6(%arg0: i32, %arg1: i32) -> (i32, i32, i32) {
    %c0_i32 = arith.constant 0 : i32
    %c0_i32_0 = arith.constant 0 : i32
    return %arg0, %c0_i32, %arg1 : i32, i32, i32
  }
  func.func @transform_7(%arg0: i32, %arg1: i32) -> (i32, i32, i32) {
    %c0_i32 = arith.constant 0 : i32
    %c0_i32_0 = arith.constant 0 : i32
    return %arg0, %c0_i32, %arg1 : i32, i32, i32
  }
}

</mosaic_0001>

<llo_original>
// kernel: tpu_custom_call.1
$region0: #{tpu_custom_call.1}
  #allocation0 [shape = 'u32[]', space=smem, size = 0x4, offset = 0x4, fixed_abs, tag = 'smem constant byte address 0x4 - core index']
  #allocation1 [shape = 'u32[144,128]{1,0:T(1,128)}', space=vmem, size = 0x12000, scoped, tag = 'internal scratch']
  #allocation2 [shape = 'bf16[1,8,32]{2,1,0:T(8,128)(2,1)}', space=vmem, size = 0x800, scoped, tag = 'scratch operand']
  %s0 = inlined_call_operand.hbm [shape: f32[2,8,32], index: 0, kind: input, shape index: {}]
  %s1 = inlined_call_operand.hbm [shape: f32[2,16,32], index: 1, kind: input, shape index: {}]
  %s2 = inlined_call_operand.hbm [shape: bf16[32,32], index: 2, kind: input, shape index: {}]
  %s3 = inlined_call_operand.vmem [shape: f32[1,32], index: 3, kind: input, shape index: {}]
  %s4 = inlined_call_operand.hbm [shape: bf16[32,32], index: 4, kind: input, shape index: {}]
  %s5 = inlined_call_operand.vmem [shape: f32[1,32], index: 5, kind: input, shape index: {}]
  %s6 = inlined_call_operand.vmem [shape: f32[2,1,16], index: 6, kind: input, shape index: {}]
  %s7 = inlined_call_operand.hbm [shape: f32[2,8,16], index: 7, kind: output, shape index: {}]
  %s8 = sld [smem:[#allocation0]]
  $region81: #{tpu_custom_call.1} parent=0
    _
  %s10 = ssub.s32 1, %s8
  %s11 = scalar_select 0, %s10, %s8
  $region1: #{tpu_custom_call.1} parent=0
    #allocation3 [shape = 'u8[8192]{0}', space=vmem, size = 0x2000, scoped, tag = 'input window, operand 0']
    #allocation4 [shape = 's32[2]{0}', space=sflag, size = 0x8, scoped, tag = 'scoped memory for tpu_custom_call.1']
    #allocation5 [shape = 's32[2]{0}', space=sflag, size = 0x8, scoped, tag = 'scoped memory for tpu_custom_call.1']
    #allocation6 [shape = 'u8[16384]{0}', space=vmem, size = 0x4000, scoped, tag = 'input window, operand 1']
    #allocation7 [shape = 's32[2]{0}', space=sflag, size = 0x8, scoped, tag = 'scoped memory for tpu_custom_call.1']
    #allocation8 [shape = 'u8[8192]{0}', space=vmem, size = 0x2000, scoped, tag = 'input window, operand 2, single buffered']
    #allocation9 [shape = 'u8[8192]{0}', space=vmem, size = 0x2000, scoped, tag = 'input window, operand 4, single buffered']
    #allocation10 [shape = 's32[1]{0}', space=sflag, size = 0x4, scoped, tag = 'scoped memory for tpu_custom_call.1']
    #allocation11 [shape = 'u8[8192]{0}', space=vmem, size = 0x2000, scoped, tag = 'output window, operand 0']
    %12 = vsyncpa [#allocation4], 0
    %s13 = scalar_lea.sflag [#allocation4], 1
    %14 = vsyncpa %s13, 0
    %15 = vsyncpa [#allocation7], 0
    %s16 = scalar_lea.sflag [#allocation7], 1
    %17 = vsyncpa %s16, 0
    %18 = vsyncpa [#allocation10], 0
    %19 = vsyncpa [#allocation5], 0
    %s20 = scalar_lea.sflag [#allocation5], 1
    %21 = vsyncpa %s20, 0
    loop: start=0, step=1, limit=4
    $region2: #{tpu_custom_call.1} parent=1 // loop_pre_header
      _
    $region3: #{tpu_custom_call.1} parent=1 // loop_header
      %s23 = sphi 0, %s27
      %p24 = scmp.ge.s32.totalorder %s23, 4
      %s30 = sphi 0, %s42
      %s31 = sphi 0, %s38
      %s32 = sphi 0, %s30
      %s33 = sphi 0, %s31
      %s34 = sphi 0, %s32
      %s35 = sphi 0, %s33
      %s45 = sphi 0, %s47
      %s48 = sphi 0, %s45
      %s49 = sphi 0, %s48
      %s65 = sphi 0, %s49
      %s73 = sphi 0, %s75
      %s76 = sphi 0, %s73
      %s77 = sphi 0, %s76
      %s93 = sphi 0, %s77
      %s97 = sphi 0, %s97
      %s99 = sphi 0, %s97
      %s100 = sphi 0, %s99
      %s114 = sphi 0, %s100
      %s118 = sphi 0, %s118
      %s120 = sphi 0, %s118
      %s121 = sphi 0, %s120
      %s135 = sphi 0, %s121
      %s139 = sphi 0, %s139
      %s141 = sphi 0, %s139
      %s142 = sphi 0, %s141
      %s156 = sphi 0, %s142
      %s160 = sphi 0, %s160
      %s162 = sphi 0, %s160
      %s163 = sphi 0, %s162
      %s177 = sphi 0, %s163
      %s185 = sphi 0, %s187
      %s188 = sphi 0, %s185
      %s189 = sphi 0, %s188
      %s205 = sphi 0, %s189
      %s213 = sphi 0, %s215
      %s216 = sphi 0, %s213
      %s217 = sphi 0, %s216
      %s233 = sphi 0, %s217
    $region4: #{tpu_custom_call.1} parent=1 // loop_header_branch
      %26 = sbr.rel (%p24) target = $region8
    $region5: #{tpu_custom_call.1} parent=1 // loop_body
      %s28 = ssub.s32 %s23, 1
      %s29 = ssub.s32 %s23, 2
      %s36 = sadd.s32 1, %s31
      %p37 = scmp.ge.s32.totalorder %s36, 1
      %s38 = scalar_select %p37, 0, %s36
      %s39 = sadd.s32 1, %s30
      %s40 = scalar_select %p37, %s39, %s30
      %p41 = scmp.ge.s32.totalorder %s40, 2
      %s42 = scalar_select %p41, 0, %s40
      %s43 = ssub.s32 %s30, %s42
      %p44 = scmp.eq.s32.totalorder %s43, 0
      %s46 = sadd.s32 %s45, 1
      %s47 = scalar_select %p44, %s45, %s46
      %p50 = pneg %p44
      %p51 = scmp.eq.s32.totalorder %s23, 1
      %p52 = por %p50, %p51
      %p53 = scmp.ne.s32.totalorder %s45, %s48
      %p54 = scmp.eq.s32.totalorder %s23, 0
      %p55 = por %p53, %p54
      %p56 = scmp.ne.s32.totalorder %s45, %s48
      %p57 = scmp.eq.s32.totalorder %s28, 1
      %p58 = por %p56, %p57
      %p59 = scmp.ne.s32.totalorder %s48, %s49
      %p60 = scmp.eq.s32.totalorder %s28, 0
      %p61 = por %p59, %p60
      %p62 = scmp.ne.s32.totalorder %s48, %s49
      %p63 = scmp.eq.s32.totalorder %s29, 1
      %p64 = por %p62, %p63
      %p66 = scmp.ne.s32.totalorder %s49, %s65
      %p67 = scmp.eq.s32.totalorder %s29, 0
      %p68 = por %p66, %p67
      %s69 = ssub.s32 %s30, %s42
      %s70 = ssub.s32 %s31, %s38
      %s71 = sor.u32 %s69, %s70
      %p72 = scmp.eq.s32.totalorder %s71, 0
      %s74 = sadd.s32 %s73, 1
      %s75 = scalar_select %p72, %s73, %s74
      %p78 = pneg %p72
      %p79 = scmp.eq.s32.totalorder %s23, 1
      %p80 = por %p78, %p79
      %p81 = scmp.ne.s32.totalorder %s73, %s76
      %p82 = scmp.eq.s32.totalorder %s23, 0
      %p83 = por %p81, %p82
      %p84 = scmp.ne.s32.totalorder %s73, %s76
      %p85 = scmp.eq.s32.totalorder %s28, 1
      %p86 = por %p84, %p85
      %p87 = scmp.ne.s32.totalorder %s76, %s77
      %p88 = scmp.eq.s32.totalorder %s28, 0
      %p89 = por %p87, %p88
      %p90 = scmp.ne.s32.totalorder %s76, %s77
      %p91 = scmp.eq.s32.totalorder %s29, 1
      %p92 = por %p90, %p91
      %p94 = scmp.ne.s32.totalorder %s77, %s93
      %p95 = scmp.eq.s32.totalorder %s29, 0
      %p96 = por %p94, %p95
      %s98 = sadd.s32 %s97, 1
      %p101 = scmp.eq.s32.totalorder %s23, 1
      %p102 = scmp.ne.s32.totalorder %s97, %s99
      %p103 = scmp.eq.s32.totalorder %s23, 0
      %p104 = por %p102, %p103
      %p105 = scmp.ne.s32.totalorder %s97, %s99
      %p106 = scmp.eq.s32.totalorder %s28, 1
      %p107 = por %p105, %p106
      %p108 = scmp.ne.s32.totalorder %s99, %s100
      %p109 = scmp.eq.s32.totalorder %s28, 0
      %p110 = por %p108, %p109
      %p111 = scmp.ne.s32.totalorder %s99, %s100
      %p112 = scmp.eq.s32.totalorder %s29, 1
      %p113 = por %p111, %p112
      %p115 = scmp.ne.s32.totalorder %s100, %s114
      %p116 = scmp.eq.s32.totalorder %s29, 0
      %p117 = por %p115, %p116
      %s119 = sadd.s32 %s118, 1
      %p122 = scmp.eq.s32.totalorder %s23, 1
      %p123 = scmp.ne.s32.totalorder %s118, %s120
      %p124 = scmp.eq.s32.totalorder %s23, 0
      %p125 = por %p123, %p124
      %p126 = scmp.ne.s32.totalorder %s118, %s120
      %p127 = scmp.eq.s32.totalorder %s28, 1
      %p128 = por %p126, %p127
      %p129 = scmp.ne.s32.totalorder %s120, %s121
      %p130 = scmp.eq.s32.totalorder %s28, 0
      %p131 = por %p129, %p130
      %p132 = scmp.ne.s32.totalorder %s120, %s121
      %p133 = scmp.eq.s32.totalorder %s29, 1
      %p134 = por %p132, %p133
      %p136 = scmp.ne.s32.totalorder %s121, %s135
      %p137 = scmp.eq.s32.totalorder %s29, 0
      %p138 = por %p136, %p137
      %s140 = sadd.s32 %s139, 1
      %p143 = scmp.eq.s32.totalorder %s23, 1
      %p144 = scmp.ne.s32.totalorder %s139, %s141
      %p145 = scmp.eq.s32.totalorder %s23, 0
      %p146 = por %p144, %p145
      %p147 = scmp.ne.s32.totalorder %s139, %s141
      %p148 = scmp.eq.s32.totalorder %s28, 1
      %p149 = por %p147, %p148
      %p150 = scmp.ne.s32.totalorder %s141, %s142
      %p151 = scmp.eq.s32.totalorder %s28, 0
      %p152 = por %p150, %p151
      %p153 = scmp.ne.s32.totalorder %s141, %s142
      %p154 = scmp.eq.s32.totalorder %s29, 1
      %p155 = por %p153, %p154
      %p157 = scmp.ne.s32.totalorder %s142, %s156
      %p158 = scmp.eq.s32.totalorder %s29, 0
      %p159 = por %p157, %p158
      %s161 = sadd.s32 %s160, 1
      %p164 = scmp.eq.s32.totalorder %s23, 1
      %p165 = scmp.ne.s32.totalorder %s160, %s162
      %p166 = scmp.eq.s32.totalorder %s23, 0
      %p167 = por %p165, %p166
      %p168 = scmp.ne.s32.totalorder %s160, %s162
      %p169 = scmp.eq.s32.totalorder %s28, 1
      %p170 = por %p168, %p169
      %p171 = scmp.ne.s32.totalorder %s162, %s163
      %p172 = scmp.eq.s32.totalorder %s28, 0
      %p173 = por %p171, %p172
      %p174 = scmp.ne.s32.totalorder %s162, %s163
      %p175 = scmp.eq.s32.totalorder %s29, 1
      %p176 = por %p174, %p175
      %p178 = scmp.ne.s32.totalorder %s163, %s177
      %p179 = scmp.eq.s32.totalorder %s29, 0
      %p180 = por %p178, %p179
      %s181 = ssub.s32 %s30, %s42
      %s182 = ssub.s32 %s31, %s38
      %s183 = sor.u32 %s181, %s182
      %p184 = scmp.eq.s32.totalorder %s183, 0
      %s186 = sadd.s32 %s185, 1
      %s187 = scalar_select %p184, %s185, %s186
      %p190 = pneg %p184
      %p191 = scmp.eq.s32.totalorder %s23, 1
      %p192 = por %p190, %p191
      %p193 = scmp.ne.s32.totalorder %s185, %s188
      %p194 = scmp.eq.s32.totalorder %s23, 0
      %p195 = por %p193, %p194
      %p196 = scmp.ne.s32.totalorder %s185, %s188
      %p197 = scmp.eq.s32.totalorder %s28, 1
      %p198 = por %p196, %p197
      %p199 = scmp.ne.s32.totalorder %s188, %s189
      %p200 = scmp.eq.s32.totalorder %s28, 0
      %p201 = por %p199, %p200
      %p202 = scmp.ne.s32.totalorder %s188, %s189
      %p203 = scmp.eq.s32.totalorder %s29, 1
      %p204 = por %p202, %p203
      %p206 = scmp.ne.s32.totalorder %s189, %s205
      %p207 = scmp.eq.s32.totalorder %s29, 0
      %p208 = por %p206, %p207
      %s209 = ssub.s32 %s30, %s42
      %s210 = ssub.s32 %s31, %s38
      %s211 = sor.u32 %s209, %s210
      %p212 = scmp.eq.s32.totalorder %s211, 0
      %s214 = sadd.s32 %s213, 1
      %s215 = scalar_select %p212, %s213, %s214
      %p218 = pneg %p212
      %p219 = scmp.eq.s32.totalorder %s23, 1
      %p220 = por %p218, %p219
      %p221 = scmp.ne.s32.totalorder %s213, %s216
      %p222 = scmp.eq.s32.totalorder %s23, 0
      %p223 = por %p221, %p222
      %p224 = scmp.ne.s32.totalorder %s213, %s216
      %p225 = scmp.eq.s32.totalorder %s28, 1
      %p226 = por %p224, %p225
      %p227 = scmp.ne.s32.totalorder %s216, %s217
      %p228 = scmp.eq.s32.totalorder %s28, 0
      %p229 = por %p227, %p228
      %p230 = scmp.ne.s32.totalorder %s216, %s217
      %p231 = scmp.eq.s32.totalorder %s29, 1
      %p232 = por %p230, %p231
      %p234 = scmp.ne.s32.totalorder %s217, %s233
      %p235 = scmp.eq.s32.totalorder %s29, 0
      %p236 = por %p234, %p235
      %p237 = scmp.le.s32.totalorder 1, %s23
      %p238 = scmp.lt.s32.totalorder %s23, 3
      %p239 = pnand %p237, %p238
      %p240 = pneg %p239
      // Predicated region
      $region9: #{tpu_custom_call.1} parent=5 // pred_check
        _
      $region10: #{tpu_custom_call.1} parent=5 // pred_check_branch
        %242 = sbr.rel (%p239) target = $region12
      $region11: #{tpu_custom_call.1} parent=5 // pred_region
        %s243 = ssub.s32 %s23, 1
        // Predicated region
        $region13: #{tpu_custom_call.1} parent=11 // pred_check
          %p244 = pneg %p110
        $region14: #{tpu_custom_call.1} parent=11 // pred_check_branch
          %246 = sbr.rel (%p244) target = $region16
        $region15: #{tpu_custom_call.1} parent=11 // pred_region
          %s248 = ssub.s32 256, 256
          %249 = vsyncadd [#allocation7], %s248
          %s250 = sshll.u32 [#allocation8], 4
          %s251 = int_to_ptr.vmem [resolvable:$true] %s250
          %256 = dma.hbm_to_vmem [thread:$0]  %s2, 256, %s251, [#allocation7], 64, 64, 4
        $region16: #{tpu_custom_call.1} parent=11 // pred_fallthru
          _
        // Predicated region
        $region17: #{tpu_custom_call.1} parent=11 // pred_check
          %p257 = pneg %p131
        $region18: #{tpu_custom_call.1} parent=11 // pred_check_branch
          %259 = sbr.rel (%p257) target = $region20
        $region19: #{tpu_custom_call.1} parent=11 // pred_region
          _
        $region20: #{tpu_custom_call.1} parent=11 // pred_fallthru
          _
        // Predicated region
        $region21: #{tpu_custom_call.1} parent=11 // pred_check
          %p260 = pneg %p152
        $region22: #{tpu_custom_call.1} parent=11 // pred_check_branch
          %262 = sbr.rel (%p260) target = $region24
        $region23: #{tpu_custom_call.1} parent=11 // pred_region
          %s264 = ssub.s32 256, 256
          %265 = vsyncadd [#allocation10], %s264
          %s266 = sshll.u32 [#allocation9], 4
          %s267 = int_to_ptr.vmem [resolvable:$true] %s266
          %272 = dma.hbm_to_vmem [thread:$0]  %s4, 256, %s267, [#allocation10], 64, 64, 4
        $region24: #{tpu_custom_call.1} parent=11 // pred_fallthru
          _
        // Predicated region
        $region25: #{tpu_custom_call.1} parent=11 // pred_check
          %p273 = pneg %p173
        $region26: #{tpu_custom_call.1} parent=11 // pred_check_branch
          %275 = sbr.rel (%p273) target = $region28
        $region27: #{tpu_custom_call.1} parent=11 // pred_region
          _
        $region28: #{tpu_custom_call.1} parent=11 // pred_fallthru
          _
      $region12: #{tpu_custom_call.1} parent=5 // pred_fallthru
        _
      %p276 = scmp.lt.s32.totalorder %s23, 2
      // Predicated region
      $region29: #{tpu_custom_call.1} parent=5 // pred_check
        %p277 = pneg %p276
      $region30: #{tpu_custom_call.1} parent=5 // pred_check_branch
        %279 = sbr.rel (%p277) target = $region32
      $region31: #{tpu_custom_call.1} parent=5 // pred_region
        // Predicated region
        $region33: #{tpu_custom_call.1} parent=31 // pred_check
          %p280 = pneg %p55
        $region34: #{tpu_custom_call.1} parent=31 // pred_check_branch
          %282 = sbr.rel (%p280) target = $region36
        $region35: #{tpu_custom_call.1} parent=31 // pred_region
          %s283 = sand.u32 %s45, 1
          %s284 = scalar_lea.sflag [#allocation4], %s283
          %s285 = sand.u32 %s45, 1
          %s286 = smul.addr %s285, 8
          %s287 = scalar_lea.vmem [#allocation3], %s286
          %s289 = ssub.s32 128, 128
          %290 = vsyncadd %s284, %s289
          %s291 = smul.addr %s30, 128
          %s292 = scalar_lea.hbm %s0, %s291
          %s294 = sshll.u32 %s287, 4
          %s295 = int_to_ptr.vmem [resolvable:$true] %s294
          %297 = dma.hbm_to_vmem [thread:$0]  %s292, 128, %s295, %s284
        $region36: #{tpu_custom_call.1} parent=31 // pred_fallthru
          _
        // Predicated region
        $region37: #{tpu_custom_call.1} parent=31 // pred_check
          %p298 = pneg %p83
        $region38: #{tpu_custom_call.1} parent=31 // pred_check_branch
          %300 = sbr.rel (%p298) target = $region40
        $region39: #{tpu_custom_call.1} parent=31 // pred_region
          %s301 = sand.u32 %s23, 1
          %s302 = scalar_lea.sflag [#allocation7], %s301
          %s303 = sand.u32 %s73, 1
          %s304 = smul.addr %s303, 16
          %s305 = scalar_lea.vmem [#allocation6], %s304
          %s306 = smul.u32 2, %s31
          %s308 = ssub.s32 256, 256
          %309 = vsyncadd %s302, %s308
          %s310 = smul.addr %s30, 2
          %s311 = sadd.s32 %s306, %s310
          %s312 = smul.addr %s311, 128
          %s313 = scalar_lea.hbm %s1, %s312
          %s314 = sshll.u32 %s305, 4
          %s315 = int_to_ptr.vmem [resolvable:$true] %s314
          %320 = dma.hbm_to_vmem [thread:$0]  %s313, 256, %s315, %s302, 128, 128, 8
        $region40: #{tpu_custom_call.1} parent=31 // pred_fallthru
          _
        // Predicated region
        $region41: #{tpu_custom_call.1} parent=31 // pred_check
          %p321 = pneg %p195
        $region42: #{tpu_custom_call.1} parent=31 // pred_check_branch
          %323 = sbr.rel (%p321) target = $region44
        $region43: #{tpu_custom_call.1} parent=31 // pred_region
          %p324 = scmp.lt.s32.totalorder %s30, 1
          %s325 = scalar_select %p324, %s30, 1
          %p326 = scmp.lt.s32.totalorder %s31, 0
          %s327 = scalar_select %p326, %s31, 0
          %s328 = sadd.s32 %s327, %s325
          %s329 = scalar_lea.vmem %s6, %s328
        $region44: #{tpu_custom_call.1} parent=31 // pred_fallthru
          _
      $region32: #{tpu_custom_call.1} parent=5 // pred_fallthru
        _
      %p330 = scmp.le.s32.totalorder 1, %s23
      %p331 = scmp.lt.s32.totalorder %s23, 3
      %p332 = pnand %p330, %p331
      %p333 = pneg %p332
      // Predicated region
      $region45: #{tpu_custom_call.1} parent=5 // pred_check
        _
      $region46: #{tpu_custom_call.1} parent=5 // pred_check_branch
        %335 = sbr.rel (%p332) target = $region48
      $region47: #{tpu_custom_call.1} parent=5 // pred_region
        %s336 = ssub.s32 %s23, 1
        %s337 = sand.u32 %s48, 1
        %s338 = scalar_lea.sflag [#allocation4], %s337
        %s339 = sand.u32 %s48, 1
        %s340 = smul.addr %s339, 8
        %s341 = scalar_lea.vmem [#allocation3], %s340
        // Predicated region
        $region49: #{tpu_custom_call.1} parent=47 // pred_check
          %p342 = pneg %p61
        $region50: #{tpu_custom_call.1} parent=47 // pred_check_branch
          %344 = sbr.rel (%p342) target = $region52
        $region51: #{tpu_custom_call.1} parent=47 // pred_region
          %345 = dma.done %s338, 128
        $region52: #{tpu_custom_call.1} parent=47 // pred_fallthru
          _
        %s346 = sand.u32 %s28, 1
        %s347 = scalar_lea.sflag [#allocation7], %s346
        %s348 = sand.u32 %s76, 1
        %s349 = smul.addr %s348, 16
        %s350 = scalar_lea.vmem [#allocation6], %s349
        // Predicated region
        $region53: #{tpu_custom_call.1} parent=47 // pred_check
          %p351 = pneg %p89
        $region54: #{tpu_custom_call.1} parent=47 // pred_check_branch
          %353 = sbr.rel (%p351) target = $region56
        $region55: #{tpu_custom_call.1} parent=47 // pred_region
          %354 = dma.done %s347, 256
        $region56: #{tpu_custom_call.1} parent=47 // pred_fallthru
          _
        // Predicated region
        $region57: #{tpu_custom_call.1} parent=47 // pred_check
          %p355 = pneg %p110
        $region58: #{tpu_custom_call.1} parent=47 // pred_check_branch
          %357 = sbr.rel (%p355) target = $region60
        $region59: #{tpu_custom_call.1} parent=47 // pred_region
          %358 = dma.done [#allocation7], 256
        $region60: #{tpu_custom_call.1} parent=47 // pred_fallthru
          _
        // Predicated region
        $region61: #{tpu_custom_call.1} parent=47 // pred_check
          %p359 = pneg %p152
        $region62: #{tpu_custom_call.1} parent=47 // pred_check_branch
          %361 = sbr.rel (%p359) target = $region64
        $region63: #{tpu_custom_call.1} parent=47 // pred_region
          %362 = dma.done [#allocation10], 256
        $region64: #{tpu_custom_call.1} parent=47 // pred_fallthru
          _
        %s363 = sand.u32 %s48, 1
        %s364 = scalar_lea.sflag [#allocation4], %s363
        %s365 = sand.u32 %s48, 1
        %s366 = smul.addr %s365, 8
        %s367 = scalar_lea.vmem [#allocation3], %s366
        %p368 = pneg %p61
        %p369 = pneg %p58
        %s370 = sand.u32 %s28, 1
        %s371 = scalar_lea.sflag [#allocation7], %s370
        %s372 = sand.u32 %s76, 1
        %s373 = smul.addr %s372, 16
        %s374 = scalar_lea.vmem [#allocation6], %s373
        %p375 = pneg %p89
        %p376 = pneg %p86
        %p377 = pneg %p110
        %p378 = pneg %p107
        %p379 = pneg %p131
        %p380 = pneg %p128
        %p381 = pneg %p152
        %p382 = pneg %p149
        %p383 = pneg %p173
        %p384 = pneg %p170
        %p385 = scmp.lt.s32.totalorder %s32, 1
        %s386 = scalar_select %p385, %s32, 1
        %p387 = scmp.lt.s32.totalorder %s33, 0
        %s388 = scalar_select %p387, %s33, 0
        %s389 = sadd.s32 %s388, %s386
        %s390 = scalar_lea.vmem %s6, %s389
        %p391 = pneg %p201
        %p392 = pneg %p198
        %p393 = pneg %p229
        %p394 = pneg %p226
        %s395 = sand.u32 %s216, 1
        %s396 = scalar_lea.sflag [#allocation5], %s395
        %s397 = sand.u32 %s216, 1
        %s398 = smul.addr %s397, 8
        %s399 = scalar_lea.vmem [#allocation11], %s398
        %s400 = smul.u32 2, %s33
        %p401 = scmp.lt.s32.totalorder %s32, 1
        %s402 = scalar_select %p401, %s32, 1
        %p403 = scmp.lt.s32.totalorder %s33, 0
        %s404 = scalar_select %p403, %s33, 0
        %s405 = sadd.s32 %s404, %s402
        %s406 = scalar_lea.vmem %s6, %s405
        %p408 = scmp.eq.s32.totalorder %s33, 0
        // Predicated region
        $region65: #{tpu_custom_call.1} parent=47 // pred_check
          %p409 = pneg %p408
        $region66: #{tpu_custom_call.1} parent=47 // pred_check_branch
          %411 = sbr.rel (%p409) target = $region68
        $region67: #{tpu_custom_call.1} parent=47 // pred_region
          %v412 = vld [vmem:[%s341] sm:$0xff]
          %v413 = vpack.c.bf16 %v412, %v412
          %v414 = vld [vmem:[#allocation8] sm:$0xf]
          %v415 = vld [vmem:[#allocation8 + $0x4] sm:$0xf]
          %v416 = vld [vmem:[#allocation8 + $0x8] sm:$0xf]
          %v417 = vld [vmem:[#allocation8 + $0xc] sm:$0xf]
          %v418 = vld [vmem:[%s3] sm:$0x1]
          %v420 = vlaneseq
          %v421 = vshrl.u32 %v420, 7
          %v422 = vsub.s32 0, %v421
          %v423 = vrot.slane %v418, %v422
          %v429 = vunpack.c.l.b16 %v414
          %v430 = vunpack.c.l.b16 %v415
          %v431 = vunpack.c.l.b16 %v416
          %v432 = vunpack.c.l.b16 %v417
          %v433 = vpack.c.b16 %v430, %v429
          %v434 = vpack.c.b16 %v432, %v431
          %vm437 = vcmask 261120
          %v439 = vsel %vm437, %v413, 0
          %441 = vmatprep.subr.bf16.mxu0 0
          %442 = vmatpush1.bf16.msra.mxu0 %v433
          %443 = vmatprep.subr.bf16.mxu0 0
          %444 = vmatpush1.bf16.msra.mxu0 %v434
          %445 = vmatprep.subr.bf16.mxu0 0
          %446 = vmatpush1.bf16.msra.mxu0 0
          %447 = vmatprep.subr.bf16.mxu0 0
          %448 = vmatpush1.bf16.msra.mxu0 0
          %449 = vmatprep.subr.bf16.mxu0 0
          %450 = vmatpush1.bf16.msra.mxu0 0
          %451 = vmatprep.subr.bf16.mxu0 0
          %452 = vmatpush1.bf16.msra.mxu0 0
          %453 = vmatprep.subr.bf16.mxu0 0
          %454 = vmatpush1.bf16.msra.mxu0 0
          %455 = vmatprep.subr.bf16.mxu0 0
          %456 = vmatpush1.bf16.msra.mxu0 0
          %457 = vmatprep.subr.bf16.mxu0 0
          %458 = vmatpush1.bf16.msra.mxu0 0
          %459 = vmatprep.subr.bf16.mxu0 0
          %460 = vmatpush1.bf16.msra.mxu0 0
          %461 = vmatprep.subr.bf16.mxu0 0
          %462 = vmatpush1.bf16.msra.mxu0 0
          %463 = vmatprep.subr.bf16.mxu0 0
          %464 = vmatpush1.bf16.msra.mxu0 0
          %465 = vmatprep.subr.bf16.mxu0 0
          %466 = vmatpush1.bf16.msra.mxu0 0
          %467 = vmatprep.subr.bf16.mxu0 0
          %468 = vmatpush1.bf16.msra.mxu0 0
          %469 = vmatprep.subr.bf16.mxu0 0
          %470 = vmatpush1.bf16.msra.mxu0 0
          %471 = vmatprep.subr.bf16.mxu0 0
          %472 = vmatpush1.bf16.msra.mxu0 0
          %473 = vmatprep.mubr.bf16.mxu0 0
          %474 = vmatmul.mubr.bf16.gmra.mrb[0].mxu0 %v439
          %v475 = vpop.f32.mrb[0].mxu0
          %v476 = vadd.f32 %v423, %v475
          %v477 = vpop.f32.mrb[0].mxu0
          %v478 = vpop.f32.mrb[0].mxu0
          %v479 = vpop.f32.mrb[0].mxu0
          %480 = vdwg.mxu0
          %v481 = vpack.c.bf16 %v476, %v476
          %vm482 = vcmask 257024
          %483 = vst.msk [vmem:[#allocation2] sm:$0xf] %vm482, %v481
        $region68: #{tpu_custom_call.1} parent=47 // pred_fallthru
          _
        %v484 = vld [vmem:[%s350] sm:$0xff]
        %v485 = vld [vmem:[%s350 + $0x8] sm:$0xff]
        %v486 = vpack.c.bf16 %v485, %v484
        %v487 = vld [vmem:[#allocation9] sm:$0xf]
        %v488 = vld [vmem:[#allocation9 + $0x4] sm:$0xf]
        %v489 = vld [vmem:[#allocation9 + $0x8] sm:$0xf]
        %v490 = vld [vmem:[#allocation9 + $0xc] sm:$0xf]
        %v491 = vld [vmem:[%s5] sm:$0x1]
        %v493 = vlaneseq
        %v494 = vshrl.u32 %v493, 7
        %v495 = vsub.s32 0, %v494
        %v496 = vrot.slane %v491, %v495
        %v502 = vunpack.c.l.b16 %v487
        %v503 = vunpack.c.l.b16 %v488
        %v504 = vunpack.c.l.b16 %v489
        %v505 = vunpack.c.l.b16 %v490
        %v506 = vpack.c.b16 %v503, %v502
        %v507 = vpack.c.b16 %v505, %v504
        %vm510 = vcmask 261120
        %v512 = vsel %vm510, %v486, 0
        %514 = vmatprep.subr.bf16.mxu0 0
        %515 = vmatpush1.bf16.msra.mxu0 %v506
        %516 = vmatprep.subr.bf16.mxu0 0
        %517 = vmatpush1.bf16.msra.mxu0 %v507
        %518 = vmatprep.subr.bf16.mxu0 0
        %519 = vmatpush1.bf16.msra.mxu0 0
        %520 = vmatprep.subr.bf16.mxu0 0
        %521 = vmatpush1.bf16.msra.mxu0 0
        %522 = vmatprep.subr.bf16.mxu0 0
        %523 = vmatpush1.bf16.msra.mxu0 0
        %524 = vmatprep.subr.bf16.mxu0 0
        %525 = vmatpush1.bf16.msra.mxu0 0
        %526 = vmatprep.subr.bf16.mxu0 0
        %527 = vmatpush1.bf16.msra.mxu0 0
        %528 = vmatprep.subr.bf16.mxu0 0
        %529 = vmatpush1.bf16.msra.mxu0 0
        %530 = vmatprep.subr.bf16.mxu0 0
        %531 = vmatpush1.bf16.msra.mxu0 0
        %532 = vmatprep.subr.bf16.mxu0 0
        %533 = vmatpush1.bf16.msra.mxu0 0
        %534 = vmatprep.subr.bf16.mxu0 0
        %535 = vmatpush1.bf16.msra.mxu0 0
        %536 = vmatprep.subr.bf16.mxu0 0
        %537 = vmatpush1.bf16.msra.mxu0 0
        %538 = vmatprep.subr.bf16.mxu0 0
        %539 = vmatpush1.bf16.msra.mxu0 0
        %540 = vmatprep.subr.bf16.mxu0 0
        %541 = vmatpush1.bf16.msra.mxu0 0
        %542 = vmatprep.subr.bf16.mxu0 0
        %543 = vmatpush1.bf16.msra.mxu0 0
        %544 = vmatprep.subr.bf16.mxu0 0
        %545 = vmatpush1.bf16.msra.mxu0 0
        %546 = vmatprep.mubr.bf16.mxu0 0
        %547 = vmatmul.mubr.bf16.gmra.mrb[0].mxu0 %v512
        %v548 = vpop.f32.mrb[0].mxu0
        %v549 = vadd.f32 %v496, %v548
        %v550 = vpop.f32.mrb[0].mxu0
        %v551 = vpop.f32.mrb[0].mxu0
        %v552 = vadd.f32 %v496, %v551
        %v553 = vpop.f32.mrb[0].mxu0
        %554 = vdwg.mxu0
        %v555 = vpack.c.bf16 %v552, %v549
        %v556 = vld [vmem:[#allocation2] sm:$0xf]
        %v557 = vld [vmem:[%s406] sm:$0x1]
        %v559 = vlaneseq
        %v560 = vshrl.u32 %v559, 7
        %v561 = vsub.s32 0, %v560
        %v562 = vrot.slane %v557, %v561
        %v565 = vsel %vm510, %v556, 0
        %v568 = vsel %vm510, %v555, 0
        %570 = vmatprep.subr.bf16.mxu0 0
        %571 = vmatpush1.bf16.xpose.msra.mxu0 %v568
        %572 = vmatprep.subr.bf16.mxu0 0
        %573 = vmatpush1.bf16.xpose.msra.mxu0 0
        %574 = vmatprep.subr.bf16.mxu0 0
        %575 = vmatpush1.bf16.xpose.msra.mxu0 0
        %576 = vmatprep.subr.bf16.mxu0 0
        %577 = vmatpush1.bf16.xpose.msra.mxu0 0
        %578 = vmatprep.subr.bf16.mxu0 0
        %579 = vmatpush1.bf16.xpose.msra.mxu0 0
        %580 = vmatprep.subr.bf16.mxu0 0
        %581 = vmatpush1.bf16.xpose.msra.mxu0 0
        %582 = vmatprep.subr.bf16.mxu0 0
        %583 = vmatpush1.bf16.xpose.msra.mxu0 0
        %584 = vmatprep.subr.bf16.mxu0 0
        %585 = vmatpush1.bf16.xpose.msra.mxu0 0
        %586 = vmatprep.subr.bf16.mxu0 0
        %587 = vmatpush1.bf16.xpose.msra.mxu0 0
        %588 = vmatprep.subr.bf16.mxu0 0
        %589 = vmatpush1.bf16.xpose.msra.mxu0 0
        %590 = vmatprep.subr.bf16.mxu0 0
        %591 = vmatpush1.bf16.xpose.msra.mxu0 0
        %592 = vmatprep.subr.bf16.mxu0 0
        %593 = vmatpush1.bf16.xpose.msra.mxu0 0
        %594 = vmatprep.subr.bf16.mxu0 0
        %595 = vmatpush1.bf16.xpose.msra.mxu0 0
        %596 = vmatprep.subr.bf16.mxu0 0
        %597 = vmatpush1.bf16.xpose.msra.mxu0 0
        %598 = vmatprep.subr.bf16.mxu0 0
        %599 = vmatpush1.bf16.xpose.msra.mxu0 0
        %600 = vmatprep.subr.bf16.mxu0 0
        %601 = vmatpush1.bf16.xpose.msra.mxu0 0
        %602 = vmatprep.mubr.bf16.mxu0 0
        %603 = vmatmul.mubr.bf16.gmra.mrb[0].mxu0 %v565
        %v604 = vpop.f32.mrb[0].mxu0
        %v605 = vadd.f32 %v562, %v604
        %v606 = vpop.f32.mrb[0].mxu0
        %v607 = vpop.f32.mrb[0].mxu0
        %v608 = vpop.f32.mrb[0].mxu0
        %609 = vdwg.mxu0
        %vm610 = vcmask 130048
        %611 = vst.msk [vmem:[%s399] sm:$0xff] %vm610, %v605
        %s612 = sand.u32 %s216, 1
        %s613 = scalar_lea.sflag [#allocation5], %s612
        %s614 = sand.u32 %s216, 1
        %s615 = smul.addr %s614, 8
        %s616 = scalar_lea.vmem [#allocation11], %s615
        // Predicated region
        $region69: #{tpu_custom_call.1} parent=47 // pred_check
          %p617 = pneg %p226
        $region70: #{tpu_custom_call.1} parent=47 // pred_check_branch
          %619 = sbr.rel (%p617) target = $region72
        $region71: #{tpu_custom_call.1} parent=47 // pred_region
          %s621 = ssub.s32 128, 128
          %622 = vsyncadd %s613, %s621
          %s623 = sadd.s32 %s33, %s32
          %s624 = smul.addr %s623, 128
          %s625 = scalar_lea.hbm %s7, %s624
          %s627 = sshll.u32 %s616, 4
          %s628 = int_to_ptr.vmem [resolvable:$true] %s627
          %630 = dma.vmem_to_hbm [thread:$0]  %s628, 128, %s625, %s613
        $region72: #{tpu_custom_call.1} parent=47 // pred_fallthru
          _
      $region48: #{tpu_custom_call.1} parent=5 // pred_fallthru
        _
      %p631 = scmp.le.s32.totalorder 2, %s23
      // Predicated region
      $region73: #{tpu_custom_call.1} parent=5 // pred_check
        %p632 = pneg %p631
      $region74: #{tpu_custom_call.1} parent=5 // pred_check_branch
        %634 = sbr.rel (%p632) target = $region76
      $region75: #{tpu_custom_call.1} parent=5 // pred_region
        %s635 = ssub.s32 %s23, 2
        // Predicated region
        $region77: #{tpu_custom_call.1} parent=75 // pred_check
          %p636 = pneg %p232
        $region78: #{tpu_custom_call.1} parent=75 // pred_check_branch
          %638 = sbr.rel (%p636) target = $region80
        $region79: #{tpu_custom_call.1} parent=75 // pred_region
          %s639 = sand.u32 %s217, 1
          %s640 = scalar_lea.sflag [#allocation5], %s639
          %s641 = sand.u32 %s217, 1
          %s642 = smul.addr %s641, 8
          %s643 = scalar_lea.vmem [#allocation11], %s642
          %644 = dma.done %s640, 128
        $region80: #{tpu_custom_call.1} parent=75 // pred_fallthru
          _
      $region76: #{tpu_custom_call.1} parent=5 // pred_fallthru
        _
    $region6: #{tpu_custom_call.1} parent=1 // loop_footer
      %s27 = sadd.s32 1, %s23
    $region7: #{tpu_custom_call.1} parent=1 // loop_footer_branch
      %22 = sbr.rel target = $region3
    $region8: #{tpu_custom_call.1} parent=1 // loop_exit
      _
    %645 = vsyncpa [#allocation4], 1
    %s646 = scalar_lea.sflag [#allocation4], 1
    %647 = vsyncpa %s646, 1
    %648 = vsyncpa [#allocation7], 1
    %s649 = scalar_lea.sflag [#allocation7], 1
    %650 = vsyncpa %s649, 1
    %651 = vsyncpa [#allocation10], 1
    %652 = vsyncpa [#allocation5], 1
    %s653 = scalar_lea.sflag [#allocation5], 1
    %654 = vsyncpa %s653, 1

// kernel: tpu_custom_call.1
$region0: #{tpu_custom_call.1}
  #allocation0 [shape = 'u32[]', space=smem, size = 0x4, offset = 0x4, fixed_abs, tag = 'smem constant byte address 0x4 - core index']
  #allocation1 [shape = 'u32[144,128]{1,0:T(1,128)}', space=vmem, size = 0x12000, scoped, tag = 'internal scratch']
  #allocation2 [shape = 'bf16[1,8,32]{2,1,0:T(8,128)(2,1)}', space=vmem, size = 0x800, scoped, tag = 'scratch operand']
  %s0 = inlined_call_operand.hbm [shape: f32[2,8,32], index: 0, kind: input, shape index: {}]
  %s1 = inlined_call_operand.hbm [shape: f32[2,16,32], index: 1, kind: input, shape index: {}]
  %s2 = inlined_call_operand.hbm [shape: bf16[32,32], index: 2, kind: input, shape index: {}]
  %s3 = inlined_call_operand.vmem [shape: f32[1,32], index: 3, kind: input, shape index: {}]
  %s4 = inlined_call_operand.hbm [shape: bf16[32,32], index: 4, kind: input, shape index: {}]
  %s5 = inlined_call_operand.vmem [shape: f32[1,32], index: 5, kind: input, shape index: {}]
  %s6 = inlined_call_operand.vmem [shape: f32[2,1,16], index: 6, kind: input, shape index: {}]
  %s7 = inlined_call_operand.hbm [shape: f32[2,8,16], index: 7, kind: output, shape index: {}]
  %s8 = sld [smem:[#allocation0]]
  $region81: #{tpu_custom_call.1} parent=0
    _
  %s10 = ssub.s32 1, %s8
  %s11 = scalar_select 0, %s10, %s8
  $region1: #{tpu_custom_call.1} parent=0
    #allocation3 [shape = 'u8[8192]{0}', space=vmem, size = 0x2000, scoped, tag = 'input window, operand 0']
    #allocation4 [shape = 's32[2]{0}', space=sflag, size = 0x8, scoped, tag = 'scoped memory for tpu_custom_call.1']
    #allocation5 [shape = 's32[2]{0}', space=sflag, size = 0x8, scoped, tag = 'scoped memory for tpu_custom_call.1']
    #allocation6 [shape = 'u8[16384]{0}', space=vmem, size = 0x4000, scoped, tag = 'input window, operand 1']
    #allocation7 [shape = 's32[2]{0}', space=sflag, size = 0x8, scoped, tag = 'scoped memory for tpu_custom_call.1']
    #allocation8 [shape = 'u8[8192]{0}', space=vmem, size = 0x2000, scoped, tag = 'input window, operand 2, single buffered']
    #allocation9 [shape = 'u8[8192]{0}', space=vmem, size = 0x2000, scoped, tag = 'input window, operand 4, single buffered']
    #allocation10 [shape = 's32[1]{0}', space=sflag, size = 0x4, scoped, tag = 'scoped memory for tpu_custom_call.1']
    #allocation11 [shape = 'u8[8192]{0}', space=vmem, size = 0x2000, scoped, tag = 'output window, operand 0']
    %12 = vsyncpa [#allocation4], 0
    %s13 = scalar_lea.sflag [#allocation4], 1
    %14 = vsyncpa %s13, 0
    %15 = vsyncpa [#allocation7], 0
    %s16 = scalar_lea.sflag [#allocation7], 1
    %17 = vsyncpa %s16, 0
    %18 = vsyncpa [#allocation10], 0
    %19 = vsyncpa [#allocation5], 0
    %s20 = scalar_lea.sflag [#allocation5], 1
    %21 = vsyncpa %s20, 0
    loop: start=0, step=1, limit=4
    $region2: #{tpu_custom_call.1} parent=1 // loop_pre_header
      _
    $region3: #{tpu_custom_call.1} parent=1 // loop_header
      %s23 = sphi 0, %s27
      %p24 = scmp.ge.s32.totalorder %s23, 4
      %s30 = sphi 0, %s42
      %s31 = sphi 0, %s38
      %s32 = sphi 0, %s30
      %s33 = sphi 0, %s31
      %s34 = sphi 0, %s32
      %s35 = sphi 0, %s33
      %s45 = sphi 0, %s47
      %s48 = sphi 0, %s45
      %s49 = sphi 0, %s48
      %s65 = sphi 0, %s49
      %s73 = sphi 0, %s75
      %s76 = sphi 0, %s73
      %s77 = sphi 0, %s76
      %s93 = sphi 0, %s77
      %s97 = sphi 0, %s97
      %s99 = sphi 0, %s97
      %s100 = sphi 0, %s99
      %s114 = sphi 0, %s100
      %s118 = sphi 0, %s118
      %s120 = sphi 0, %s118
      %s121 = sphi 0, %s120
      %s135 = sphi 0, %s121
      %s139 = sphi 0, %s139
      %s141 = sphi 0, %s139
      %s142 = sphi 0, %s141
      %s156 = sphi 0, %s142
      %s160 = sphi 0, %s160
      %s162 = sphi 0, %s160
      %s163 = sphi 0, %s162
      %s177 = sphi 0, %s163
      %s185 = sphi 0, %s187
      %s188 = sphi 0, %s185
      %s189 = sphi 0, %s188
      %s205 = sphi 0, %s189
      %s213 = sphi 0, %s215
      %s216 = sphi 0, %s213
      %s217 = sphi 0, %s216
      %s233 = sphi 0, %s217
    $region4: #{tpu_custom_call.1} parent=1 // loop_header_branch
      %26 = sbr.rel (%p24) target = $region8
    $region5: #{tpu_custom_call.1} parent=1 // loop_body
      %s28 = ssub.s32 %s23, 1
      %s29 = ssub.s32 %s23, 2
      %s36 = sadd.s32 1, %s31
      %p37 = scmp.ge.s32.totalorder %s36, 1
      %s38 = scalar_select %p37, 0, %s36
      %s39 = sadd.s32 1, %s30
      %s40 = scalar_select %p37, %s39, %s30
      %p41 = scmp.ge.s32.totalorder %s40, 2
      %s42 = scalar_select %p41, 0, %s40
      %s43 = ssub.s32 %s30, %s42
      %p44 = scmp.eq.s32.totalorder %s43, 0
      %s46 = sadd.s32 %s45, 1
      %s47 = scalar_select %p44, %s45, %s46
      %p50 = pneg %p44
      %p51 = scmp.eq.s32.totalorder %s23, 1
      %p52 = por %p50, %p51
      %p53 = scmp.ne.s32.totalorder %s45, %s48
      %p54 = scmp.eq.s32.totalorder %s23, 0
      %p55 = por %p53, %p54
      %p56 = scmp.ne.s32.totalorder %s45, %s48
      %p57 = scmp.eq.s32.totalorder %s28, 1
      %p58 = por %p56, %p57
      %p59 = scmp.ne.s32.totalorder %s48, %s49
      %p60 = scmp.eq.s32.totalorder %s28, 0
      %p61 = por %p59, %p60
      %p62 = scmp.ne.s32.totalorder %s48, %s49
      %p63 = scmp.eq.s32.totalorder %s29, 1
      %p64 = por %p62, %p63
      %p66 = scmp.ne.s32.totalorder %s49, %s65
      %p67 = scmp.eq.s32.totalorder %s29, 0
      %p68 = por %p66, %p67
      %s69 = ssub.s32 %s30, %s42
      %s70 = ssub.s32 %s31, %s38
      %s71 = sor.u32 %s69, %s70
      %p72 = scmp.eq.s32.totalorder %s71, 0
      %s74 = sadd.s32 %s73, 1
      %s75 = scalar_select %p72, %s73, %s74
      %p78 = pneg %p72
      %p79 = scmp.eq.s32.totalorder %s23, 1
      %p80 = por %p78, %p79
      %p81 = scmp.ne.s32.totalorder %s73, %s76
      %p82 = scmp.eq.s32.totalorder %s23, 0
      %p83 = por %p81, %p82
      %p84 = scmp.ne.s32.totalorder %s73, %s76
      %p85 = scmp.eq.s32.totalorder %s28, 1
      %p86 = por %p84, %p85
      %p87 = scmp.ne.s32.totalorder %s76, %s77
      %p88 = scmp.eq.s32.totalorder %s28, 0
      %p89 = por %p87, %p88
      %p90 = scmp.ne.s32.totalorder %s76, %s77
      %p91 = scmp.eq.s32.totalorder %s29, 1
      %p92 = por %p90, %p91
      %p94 = scmp.ne.s32.totalorder %s77, %s93
      %p95 = scmp.eq.s32.totalorder %s29, 0
      %p96 = por %p94, %p95
      %s98 = sadd.s32 %s97, 1
      %p101 = scmp.eq.s32.totalorder %s23, 1
      %p102 = scmp.ne.s32.totalorder %s97, %s99
      %p103 = scmp.eq.s32.totalorder %s23, 0
      %p104 = por %p102, %p103
      %p105 = scmp.ne.s32.totalorder %s97, %s99
      %p106 = scmp.eq.s32.totalorder %s28, 1
      %p107 = por %p105, %p106
      %p108 = scmp.ne.s32.totalorder %s99, %s100
      %p109 = scmp.eq.s32.totalorder %s28, 0
      %p110 = por %p108, %p109
      %p111 = scmp.ne.s32.totalorder %s99, %s100
      %p112 = scmp.eq.s32.totalorder %s29, 1
      %p113 = por %p111, %p112
      %p115 = scmp.ne.s32.totalorder %s100, %s114
      %p116 = scmp.eq.s32.totalorder %s29, 0
      %p117 = por %p115, %p116
      %s119 = sadd.s32 %s118, 1
      %p122 = scmp.eq.s32.totalorder %s23, 1
      %p123 = scmp.ne.s32.totalorder %s118, %s120
      %p124 = scmp.eq.s32.totalorder %s23, 0
      %p125 = por %p123, %p124
      %p126 = scmp.ne.s32.totalorder %s118, %s120
      %p127 = scmp.eq.s32.totalorder %s28, 1
      %p128 = por %p126, %p127
      %p129 = scmp.ne.s32.totalorder %s120, %s121
      %p130 = scmp.eq.s32.totalorder %s28, 0
      %p131 = por %p129, %p130
      %p132 = scmp.ne.s32.totalorder %s120, %s121
      %p133 = scmp.eq.s32.totalorder %s29, 1
      %p134 = por %p132, %p133
      %p136 = scmp.ne.s32.totalorder %s121, %s135
      %p137 = scmp.eq.s32.totalorder %s29, 0
      %p138 = por %p136, %p137
      %s140 = sadd.s32 %s139, 1
      %p143 = scmp.eq.s32.totalorder %s23, 1
      %p144 = scmp.ne.s32.totalorder %s139, %s141
      %p145 = scmp.eq.s32.totalorder %s23, 0
      %p146 = por %p144, %p145
      %p147 = scmp.ne.s32.totalorder %s139, %s141
      %p148 = scmp.eq.s32.totalorder %s28, 1
      %p149 = por %p147, %p148
      %p150 = scmp.ne.s32.totalorder %s141, %s142
      %p151 = scmp.eq.s32.totalorder %s28, 0
      %p152 = por %p150, %p151
      %p153 = scmp.ne.s32.totalorder %s141, %s142
      %p154 = scmp.eq.s32.totalorder %s29, 1
      %p155 = por %p153, %p154
      %p157 = scmp.ne.s32.totalorder %s142, %s156
      %p158 = scmp.eq.s32.totalorder %s29, 0
      %p159 = por %p157, %p158
      %s161 = sadd.s32 %s160, 1
      %p164 = scmp.eq.s32.totalorder %s23, 1
      %p165 = scmp.ne.s32.totalorder %s160, %s162
      %p166 = scmp.eq.s32.totalorder %s23, 0
      %p167 = por %p165, %p166
      %p168 = scmp.ne.s32.totalorder %s160, %s162
      %p169 = scmp.eq.s32.totalorder %s28, 1
      %p170 = por %p168, %p169
      %p171 = scmp.ne.s32.totalorder %s162, %s163
      %p172 = scmp.eq.s32.totalorder %s28, 0
      %p173 = por %p171, %p172
      %p174 = scmp.ne.s32.totalorder %s162, %s163
      %p175 = scmp.eq.s32.totalorder %s29, 1
      %p176 = por %p174, %p175
      %p178 = scmp.ne.s32.totalorder %s163, %s177
      %p179 = scmp.eq.s32.totalorder %s29, 0
      %p180 = por %p178, %p179
      %s181 = ssub.s32 %s30, %s42
      %s182 = ssub.s32 %s31, %s38
      %s183 = sor.u32 %s181, %s182
      %p184 = scmp.eq.s32.totalorder %s183, 0
      %s186 = sadd.s32 %s185, 1
      %s187 = scalar_select %p184, %s185, %s186
      %p190 = pneg %p184
      %p191 = scmp.eq.s32.totalorder %s23, 1
      %p192 = por %p190, %p191
      %p193 = scmp.ne.s32.totalorder %s185, %s188
      %p194 = scmp.eq.s32.totalorder %s23, 0
      %p195 = por %p193, %p194
      %p196 = scmp.ne.s32.totalorder %s185, %s188
      %p197 = scmp.eq.s32.totalorder %s28, 1
      %p198 = por %p196, %p197
      %p199 = scmp.ne.s32.totalorder %s188, %s189
      %p200 = scmp.eq.s32.totalorder %s28, 0
      %p201 = por %p199, %p200
      %p202 = scmp.ne.s32.totalorder %s188, %s189
      %p203 = scmp.eq.s32.totalorder %s29, 1
      %p204 = por %p202, %p203
      %p206 = scmp.ne.s32.totalorder %s189, %s205
      %p207 = scmp.eq.s32.totalorder %s29, 0
      %p208 = por %p206, %p207
      %s209 = ssub.s32 %s30, %s42
      %s210 = ssub.s32 %s31, %s38
      %s211 = sor.u32 %s209, %s210
      %p212 = scmp.eq.s32.totalorder %s211, 0
      %s214 = sadd.s32 %s213, 1
      %s215 = scalar_select %p212, %s213, %s214
      %p218 = pneg %p212
      %p219 = scmp.eq.s32.totalorder %s23, 1
      %p220 = por %p218, %p219
      %p221 = scmp.ne.s32.totalorder %s213, %s216
      %p222 = scmp.eq.s32.totalorder %s23, 0
      %p223 = por %p221, %p222
      %p224 = scmp.ne.s32.totalorder %s213, %s216
      %p225 = scmp.eq.s32.totalorder %s28, 1
      %p226 = por %p224, %p225
      %p227 = scmp.ne.s32.totalorder %s216, %s217
      %p228 = scmp.eq.s32.totalorder %s28, 0
      %p229 = por %p227, %p228
      %p230 = scmp.ne.s32.totalorder %s216, %s217
      %p231 = scmp.eq.s32.totalorder %s29, 1
      %p232 = por %p230, %p231
      %p234 = scmp.ne.s32.totalorder %s217, %s233
      %p235 = scmp.eq.s32.totalorder %s29, 0
      %p236 = por %p234, %p235
      %p237 = scmp.le.s32.totalorder 1, %s23
      %p238 = scmp.lt.s32.totalorder %s23, 3
      %p239 = pnand %p237, %p238
      %p240 = pneg %p239
      // Predicated region
      $region9: #{tpu_custom_call.1} parent=5 // pred_check
        _
      $region10: #{tpu_custom_call.1} parent=5 // pred_check_branch
        %242 = sbr.rel (%p239) target = $region12
      $region11: #{tpu_custom_call.1} parent=5 // pred_region
        %s243 = ssub.s32 %s23, 1
        // Predicated region
        $region13: #{tpu_custom_call.1} parent=11 // pred_check
          %p244 = pneg %p110
        $region14: #{tpu_custom_call.1} parent=11 // pred_check_branch
          %246 = sbr.rel (%p244) target = $region16
        $region15: #{tpu_custom_call.1} parent=11 // pred_region
          %s248 = ssub.s32 256, 256
          %249 = vsyncadd [#allocation7], %s248
          %s250 = sshll.u32 [#allocation8], 4
          %s251 = int_to_ptr.vmem [resolvable:$true] %s250
          %256 = dma.hbm_to_vmem [thread:$0]  %s2, 256, %s251, [#allocation7], 64, 64, 4
        $region16: #{tpu_custom_call.1} parent=11 // pred_fallthru
          _
        // Predicated region
        $region17: #{tpu_custom_call.1} parent=11 // pred_check
          %p257 = pneg %p131
        $region18: #{tpu_custom_call.1} parent=11 // pred_check_branch
          %259 = sbr.rel (%p257) target = $region20
        $region19: #{tpu_custom_call.1} parent=11 // pred_region
          _
        $region20: #{tpu_custom_call.1} parent=11 // pred_fallthru
          _
        // Predicated region
        $region21: #{tpu_custom_call.1} parent=11 // pred_check
          %p260 = pneg %p152
        $region22: #{tpu_custom_call.1} parent=11 // pred_check_branch
          %262 = sbr.rel (%p260) target = $region24
        $region23: #{tpu_custom_call.1} parent=11 // pred_region
          %s264 = ssub.s32 256, 256
          %265 = vsyncadd [#allocation10], %s264
          %s266 = sshll.u32 [#allocation9], 4
          %s267 = int_to_ptr.vmem [resolvable:$true] %s266
          %272 = dma.hbm_to_vmem [thread:$0]  %s4, 256, %s267, [#allocation10], 64, 64, 4
        $region24: #{tpu_custom_call.1} parent=11 // pred_fallthru
          _
        // Predicated region
        $region25: #{tpu_custom_call.1} parent=11 // pred_check
          %p273 = pneg %p173
        $region26: #{tpu_custom_call.1} parent=11 // pred_check_branch
          %275 = sbr.rel (%p273) target = $region28
        $region27: #{tpu_custom_call.1} parent=11 // pred_region
          _
        $region28: #{tpu_custom_call.1} parent=11 // pred_fallthru
          _
      $region12: #{tpu_custom_call.1} parent=5 // pred_fallthru
        _
      %p276 = scmp.lt.s32.totalorder %s23, 2
      // Predicated region
      $region29: #{tpu_custom_call.1} parent=5 // pred_check
        %p277 = pneg %p276
      $region30: #{tpu_custom_call.1} parent=5 // pred_check_branch
        %279 = sbr.rel (%p277) target = $region32
      $region31: #{tpu_custom_call.1} parent=5 // pred_region
        // Predicated region
        $region33: #{tpu_custom_call.1} parent=31 // pred_check
          %p280 = pneg %p55
        $region34: #{tpu_custom_call.1} parent=31 // pred_check_branch
          %282 = sbr.rel (%p280) target = $region36
        $region35: #{tpu_custom_call.1} parent=31 // pred_region
          %s283 = sand.u32 %s45, 1
          %s284 = scalar_lea.sflag [#allocation4], %s283
          %s285 = sand.u32 %s45, 1
          %s286 = smul.addr %s285, 8
          %s287 = scalar_lea.vmem [#allocation3], %s286
          %s289 = ssub.s32 128, 128
          %290 = vsyncadd %s284, %s289
          %s291 = smul.addr %s30, 128
          %s292 = scalar_lea.hbm %s0, %s291
          %s294 = sshll.u32 %s287, 4
          %s295 = int_to_ptr.vmem [resolvable:$true] %s294
          %297 = dma.hbm_to_vmem [thread:$0]  %s292, 128, %s295, %s284
        $region36: #{tpu_custom_call.1} parent=31 // pred_fallthru
          _
        // Predicated region
        $region37: #{tpu_custom_call.1} parent=31 // pred_check
          %p298 = pneg %p83
        $region38: #{tpu_custom_call.1} parent=31 // pred_check_branch
          %300 = sbr.rel (%p298) target = $region40
        $region39: #{tpu_custom_call.1} parent=31 // pred_region
          %s301 = sand.u32 %s23, 1
          %s302 = scalar_lea.sflag [#allocation7], %s301
          %s303 = sand.u32 %s73, 1
          %s304 = smul.addr %s303, 16
          %s305 = scalar_lea.vmem [#allocation6], %s304
          %s306 = smul.u32 2, %s31
          %s308 = ssub.s32 256, 256
          %309 = vsyncadd %s302, %s308
          %s310 = smul.addr %s30, 2
          %s311 = sadd.s32 %s306, %s310
          %s312 = smul.addr %s311, 128
          %s313 = scalar_lea.hbm %s1, %s312
          %s314 = sshll.u32 %s305, 4
          %s315 = int_to_ptr.vmem [resolvable:$true] %s314
          %320 = dma.hbm_to_vmem [thread:$0]  %s313, 256, %s315, %s302, 128, 128, 8
        $region40: #{tpu_custom_call.1} parent=31 // pred_fallthru
          _
        // Predicated region
        $region41: #{tpu_custom_call.1} parent=31 // pred_check
          %p321 = pneg %p195
        $region42: #{tpu_custom_call.1} parent=31 // pred_check_branch
          %323 = sbr.rel (%p321) target = $region44
        $region43: #{tpu_custom_call.1} parent=31 // pred_region
          %p324 = scmp.lt.s32.totalorder %s30, 1
          %s325 = scalar_select %p324, %s30, 1
          %p326 = scmp.lt.s32.totalorder %s31, 0
          %s327 = scalar_select %p326, %s31, 0
          %s328 = sadd.s32 %s327, %s325
          %s329 = scalar_lea.vmem %s6, %s328
        $region44: #{tpu_custom_call.1} parent=31 // pred_fallthru
          _
      $region32: #{tpu_custom_call.1} parent=5 // pred_fallthru
        _
      %p330 = scmp.le.s32.totalorder 1, %s23
      %p331 = scmp.lt.s32.totalorder %s23, 3
      %p332 = pnand %p330, %p331
      %p333 = pneg %p332
      // Predicated region
      $region45: #{tpu_custom_call.1} parent=5 // pred_check
        _
      $region46: #{tpu_custom_call.1} parent=5 // pred_check_branch
        %335 = sbr.rel (%p332) target = $region48
      $region47: #{tpu_custom_call.1} parent=5 // pred_region
        %s336 = ssub.s32 %s23, 1
        %s337 = sand.u32 %s48, 1
        %s338 = scalar_lea.sflag [#allocation4], %s337
        %s339 = sand.u32 %s48, 1
        %s340 = smul.addr %s339, 8
        %s341 = scalar_lea.vmem [#allocation3], %s340
        // Predicated region
        $region49: #{tpu_custom_call.1} parent=47 // pred_check
          %p342 = pneg %p61
        $region50: #{tpu_custom_call.1} parent=47 // pred_check_branch
          %344 = sbr.rel (%p342) target = $region52
        $region51: #{tpu_custom_call.1} parent=47 // pred_region
          %345 = dma.done %s338, 128
        $region52: #{tpu_custom_call.1} parent=47 // pred_fallthru
          _
        %s346 = sand.u32 %s28, 1
        %s347 = scalar_lea.sflag [#allocation7], %s346
        %s348 = sand.u32 %s76, 1
        %s349 = smul.addr %s348, 16
        %s350 = scalar_lea.vmem [#allocation6], %s349
        // Predicated region
        $region53: #{tpu_custom_call.1} parent=47 // pred_check
          %p351 = pneg %p89
        $region54: #{tpu_custom_call.1} parent=47 // pred_check_branch
          %353 = sbr.rel (%p351) target = $region56
        $region55: #{tpu_custom_call.1} parent=47 // pred_region
          %354 = dma.done %s347, 256
        $region56: #{tpu_custom_call.1} parent=47 // pred_fallthru
          _
        // Predicated region
        $region57: #{tpu_custom_call.1} parent=47 // pred_check
          %p355 = pneg %p110
        $region58: #{tpu_custom_call.1} parent=47 // pred_check_branch
          %357 = sbr.rel (%p355) target = $region60
        $region59: #{tpu_custom_call.1} parent=47 // pred_region
          %358 = dma.done [#allocation7], 256
        $region60: #{tpu_custom_call.1} parent=47 // pred_fallthru
          _
        // Predicated region
        $region61: #{tpu_custom_call.1} parent=47 // pred_check
          %p359 = pneg %p152
        $region62: #{tpu_custom_call.1} parent=47 // pred_check_branch
          %361 = sbr.rel (%p359) target = $region64
        $region63: #{tpu_custom_call.1} parent=47 // pred_region
          %362 = dma.done [#allocation10], 256
        $region64: #{tpu_custom_call.1} parent=47 // pred_fallthru
          _
        %s363 = sand.u32 %s48, 1
        %s364 = scalar_lea.sflag [#allocation4], %s363
        %s365 = sand.u32 %s48, 1
        %s366 = smul.addr %s365, 8
        %s367 = scalar_lea.vmem [#allocation3], %s366
        %p368 = pneg %p61
        %p369 = pneg %p58
        %s370 = sand.u32 %s28, 1
        %s371 = scalar_lea.sflag [#allocation7], %s370
        %s372 = sand.u32 %s76, 1
        %s373 = smul.addr %s372, 16
        %s374 = scalar_lea.vmem [#allocation6], %s373
        %p375 = pneg %p89
        %p376 = pneg %p86
        %p377 = pneg %p110
        %p378 = pneg %p107
        %p379 = pneg %p131
        %p380 = pneg %p128
        %p381 = pneg %p152
        %p382 = pneg %p149
        %p383 = pneg %p173
        %p384 = pneg %p170
        %p385 = scmp.lt.s32.totalorder %s32, 1
        %s386 = scalar_select %p385, %s32, 1
        %p387 = scmp.lt.s32.totalorder %s33, 0
        %s388 = scalar_select %p387, %s33, 0
        %s389 = sadd.s32 %s388, %s386
        %s390 = scalar_lea.vmem %s6, %s389
        %p391 = pneg %p201
        %p392 = pneg %p198
        %p393 = pneg %p229
        %p394 = pneg %p226
        %s395 = sand.u32 %s216, 1
        %s396 = scalar_lea.sflag [#allocation5], %s395
        %s397 = sand.u32 %s216, 1
        %s398 = smul.addr %s397, 8
        %s399 = scalar_lea.vmem [#allocation11], %s398
        %s400 = smul.u32 2, %s33
        %p401 = scmp.lt.s32.totalorder %s32, 1
        %s402 = scalar_select %p401, %s32, 1
        %p403 = scmp.lt.s32.totalorder %s33, 0
        %s404 = scalar_select %p403, %s33, 0
        %s405 = sadd.s32 %s404, %s402
        %s406 = scalar_lea.vmem %s6, %s405
        %p408 = scmp.eq.s32.totalorder %s33, 0
        // Predicated region
        $region65: #{tpu_custom_call.1} parent=47 // pred_check
          %p409 = pneg %p408
        $region66: #{tpu_custom_call.1} parent=47 // pred_check_branch
          %411 = sbr.rel (%p409) target = $region68
        $region67: #{tpu_custom_call.1} parent=47 // pred_region
          %v412 = vld [vmem:[%s341] sm:$0xff]
          %v413 = vpack.c.bf16 %v412, %v412
          %v414 = vld [vmem:[#allocation8] sm:$0xf]
          %v415 = vld [vmem:[#allocation8 + $0x4] sm:$0xf]
          %v416 = vld [vmem:[#allocation8 + $0x8] sm:$0xf]
          %v417 = vld [vmem:[#allocation8 + $0xc] sm:$0xf]
          %v418 = vld [vmem:[%s3] sm:$0x1]
          %v420 = vlaneseq
          %v421 = vshrl.u32 %v420, 7
          %v422 = vsub.s32 0, %v421
          %v423 = vrot.slane %v418, %v422
          %v429 = vunpack.c.l.b16 %v414
          %v430 = vunpack.c.l.b16 %v415
          %v431 = vunpack.c.l.b16 %v416
          %v432 = vunpack.c.l.b16 %v417
          %v433 = vpack.c.b16 %v430, %v429
          %v434 = vpack.c.b16 %v432, %v431
          %vm437 = vcmask 261120
          %v439 = vsel %vm437, %v413, 0
          %441 = vmatprep.subr.bf16.mxu0 0
          %442 = vmatpush1.bf16.msra.mxu0 %v433
          %443 = vmatprep.subr.bf16.mxu0 0
          %444 = vmatpush1.bf16.msra.mxu0 %v434
          %445 = vmatprep.subr.bf16.mxu0 0
          %446 = vmatpush1.bf16.msra.mxu0 0
          %447 = vmatprep.subr.bf16.mxu0 0
          %448 = vmatpush1.bf16.msra.mxu0 0
          %449 = vmatprep.subr.bf16.mxu0 0
          %450 = vmatpush1.bf16.msra.mxu0 0
          %451 = vmatprep.subr.bf16.mxu0 0
          %452 = vmatpush1.bf16.msra.mxu0 0
          %453 = vmatprep.subr.bf16.mxu0 0
          %454 = vmatpush1.bf16.msra.mxu0 0
          %455 = vmatprep.subr.bf16.mxu0 0
          %456 = vmatpush1.bf16.msra.mxu0 0
          %457 = vmatprep.subr.bf16.mxu0 0
          %458 = vmatpush1.bf16.msra.mxu0 0
          %459 = vmatprep.subr.bf16.mxu0 0
          %460 = vmatpush1.bf16.msra.mxu0 0
          %461 = vmatprep.subr.bf16.mxu0 0
          %462 = vmatpush1.bf16.msra.mxu0 0
          %463 = vmatprep.subr.bf16.mxu0 0
          %464 = vmatpush1.bf16.msra.mxu0 0
          %465 = vmatprep.subr.bf16.mxu0 0
          %466 = vmatpush1.bf16.msra.mxu0 0
          %467 = vmatprep.subr.bf16.mxu0 0
          %468 = vmatpush1.bf16.msra.mxu0 0
          %469 = vmatprep.subr.bf16.mxu0 0
          %470 = vmatpush1.bf16.msra.mxu0 0
          %471 = vmatprep.subr.bf16.mxu0 0
          %472 = vmatpush1.bf16.msra.mxu0 0
          %473 = vmatprep.mubr.bf16.mxu0 0
          %474 = vmatmul.mubr.bf16.gmra.mrb[0].mxu0 %v439
          %v475 = vpop.f32.mrb[0].mxu0
          %v476 = vadd.f32 %v423, %v475
          %v477 = vpop.f32.mrb[0].mxu0
          %v478 = vpop.f32.mrb[0].mxu0
          %v479 = vpop.f32.mrb[0].mxu0
          %480 = vdwg.mxu0
          %v481 = vpack.c.bf16 %v476, %v476
          %vm482 = vcmask 257024
          %483 = vst.msk [vmem:[#allocation2] sm:$0xf] %vm482, %v481
        $region68: #{tpu_custom_call.1} parent=47 // pred_fallthru
          _
        %v484 = vld [vmem:[%s350] sm:$0xff]
        %v485 = vld [vmem:[%s350 + $0x8] sm:$0xff]
        %v486 = vpack.c.bf16 %v485, %v484
        %v487 = vld [vmem:[#allocation9] sm:$0xf]
        %v488 = vld [vmem:[#allocation9 + $0x4] sm:$0xf]
        %v489 = vld [vmem:[#allocation9 + $0x8] sm:$0xf]
        %v490 = vld [vmem:[#allocation9 + $0xc] sm:$0xf]
        %v491 = vld [vmem:[%s5] sm:$0x1]
        %v493 = vlaneseq
        %v494 = vshrl.u32 %v493, 7
        %v495 = vsub.s32 0, %v494
        %v496 = vrot.slane %v491, %v495
        %v502 = vunpack.c.l.b16 %v487
        %v503 = vunpack.c.l.b16 %v488
        %v504 = vunpack.c.l.b16 %v489
        %v505 = vunpack.c.l.b16 %v490
        %v506 = vpack.c.b16 %v503, %v502
        %v507 = vpack.c.b16 %v505, %v504
        %vm510 = vcmask 261120
        %v512 = vsel %vm510, %v486, 0
        %514 = vmatprep.subr.bf16.mxu0 0
        %515 = vmatpush1.bf16.msra.mxu0 %v506
        %516 = vmatprep.subr.bf16.mxu0 0
        %517 = vmatpush1.bf16.msra.mxu0 %v507
        %518 = vmatprep.subr.bf16.mxu0 0
        %519 = vmatpush1.bf16.msra.mxu0 0
        %520 = vmatprep.subr.bf16.mxu0 0
        %521 = vmatpush1.bf16.msra.mxu0 0
        %522 = vmatprep.subr.bf16.mxu0 0
        %523 = vmatpush1.bf16.msra.mxu0 0
        %524 = vmatprep.subr.bf16.mxu0 0
        %525 = vmatpush1.bf16.msra.mxu0 0
        %526 = vmatprep.subr.bf16.mxu0 0
        %527 = vmatpush1.bf16.msra.mxu0 0
        %528 = vmatprep.subr.bf16.mxu0 0
        %529 = vmatpush1.bf16.msra.mxu0 0
        %530 = vmatprep.subr.bf16.mxu0 0
        %531 = vmatpush1.bf16.msra.mxu0 0
        %532 = vmatprep.subr.bf16.mxu0 0
        %533 = vmatpush1.bf16.msra.mxu0 0
        %534 = vmatprep.subr.bf16.mxu0 0
        %535 = vmatpush1.bf16.msra.mxu0 0
        %536 = vmatprep.subr.bf16.mxu0 0
        %537 = vmatpush1.bf16.msra.mxu0 0
        %538 = vmatprep.subr.bf16.mxu0 0
        %539 = vmatpush1.bf16.msra.mxu0 0
        %540 = vmatprep.subr.bf16.mxu0 0
        %541 = vmatpush1.bf16.msra.mxu0 0
        %542 = vmatprep.subr.bf16.mxu0 0
        %543 = vmatpush1.bf16.msra.mxu0 0
        %544 = vmatprep.subr.bf16.mxu0 0
        %545 = vmatpush1.bf16.msra.mxu0 0
        %546 = vmatprep.mubr.bf16.mxu0 0
        %547 = vmatmul.mubr.bf16.gmra.mrb[0].mxu0 %v512
        %v548 = vpop.f32.mrb[0].mxu0
        %v549 = vadd.f32 %v496, %v548
        %v550 = vpop.f32.mrb[0].mxu0
        %v551 = vpop.f32.mrb[0].mxu0
        %v552 = vadd.f32 %v496, %v551
        %v553 = vpop.f32.mrb[0].mxu0
        %554 = vdwg.mxu0
        %v555 = vpack.c.bf16 %v552, %v549
        %v556 = vld [vmem:[#allocation2] sm:$0xf]
        %v557 = vld [vmem:[%s406] sm:$0x1]
        %v559 = vlaneseq
        %v560 = vshrl.u32 %v559, 7
        %v561 = vsub.s32 0, %v560
        %v562 = vrot.slane %v557, %v561
        %v565 = vsel %vm510, %v556, 0
        %v568 = vsel %vm510, %v555, 0
        %570 = vmatprep.subr.bf16.mxu0 0
        %571 = vmatpush1.bf16.xpose.msra.mxu0 %v568
        %572 = vmatprep.subr.bf16.mxu0 0
        %573 = vmatpush1.bf16.xpose.msra.mxu0 0
        %574 = vmatprep.subr.bf16.mxu0 0
        %575 = vmatpush1.bf16.xpose.msra.mxu0 0
        %576 = vmatprep.subr.bf16.mxu0 0
        %577 = vmatpush1.bf16.xpose.msra.mxu0 0
        %578 = vmatprep.subr.bf16.mxu0 0
        %579 = vmatpush1.bf16.xpose.msra.mxu0 0
        %580 = vmatprep.subr.bf16.mxu0 0
        %581 = vmatpush1.bf16.xpose.msra.mxu0 0
        %582 = vmatprep.subr.bf16.mxu0 0
        %583 = vmatpush1.bf16.xpose.msra.mxu0 0
        %584 = vmatprep.subr.bf16.mxu0 0
        %585 = vmatpush1.bf16.xpose.msra.mxu0 0
        %586 = vmatprep.subr.bf16.mxu0 0
        %587 = vmatpush1.bf16.xpose.msra.mxu0 0
        %588 = vmatprep.subr.bf16.mxu0 0
        %589 = vmatpush1.bf16.xpose.msra.mxu0 0
        %590 = vmatprep.subr.bf16.mxu0 0
        %591 = vmatpush1.bf16.xpose.msra.mxu0 0
        %592 = vmatprep.subr.bf16.mxu0 0
        %593 = vmatpush1.bf16.xpose.msra.mxu0 0
        %594 = vmatprep.subr.bf16.mxu0 0
        %595 = vmatpush1.bf16.xpose.msra.mxu0 0
        %596 = vmatprep.subr.bf16.mxu0 0
        %597 = vmatpush1.bf16.xpose.msra.mxu0 0
        %598 = vmatprep.subr.bf16.mxu0 0
        %599 = vmatpush1.bf16.xpose.msra.mxu0 0
        %600 = vmatprep.subr.bf16.mxu0 0
        %601 = vmatpush1.bf16.xpose.msra.mxu0 0
        %602 = vmatprep.mubr.bf16.mxu0 0
        %603 = vmatmul.mubr.bf16.gmra.mrb[0].mxu0 %v565
        %v604 = vpop.f32.mrb[0].mxu0
        %v605 = vadd.f32 %v562, %v604
        %v606 = vpop.f32.mrb[0].mxu0
        %v607 = vpop.f32.mrb[0].mxu0
        %v608 = vpop.f32.mrb[0].mxu0
        %609 = vdwg.mxu0
        %vm610 = vcmask 130048
        %611 = vst.msk [vmem:[%s399] sm:$0xff] %vm610, %v605
        %s612 = sand.u32 %s216, 1
        %s613 = scalar_lea.sflag [#allocation5], %s612
        %s614 = sand.u32 %s216, 1
        %s615 = smul.addr %s614, 8
        %s616 = scalar_lea.vmem [#allocation11], %s615
        // Predicated region
        $region69: #{tpu_custom_call.1} parent=47 // pred_check
          %p617 = pneg %p226
        $region70: #{tpu_custom_call.1} parent=47 // pred_check_branch
          %619 = sbr.rel (%p617) target = $region72
        $region71: #{tpu_custom_call.1} parent=47 // pred_region
          %s621 = ssub.s32 128, 128
          %622 = vsyncadd %s613, %s621
          %s623 = sadd.s32 %s33, %s32
          %s624 = smul.addr %s623, 128
          %s625 = scalar_lea.hbm %s7, %s624
          %s627 = sshll.u32 %s616, 4
          %s628 = int_to_ptr.vmem [resolvable:$true] %s627
          %630 = dma.vmem_to_hbm [thread:$0]  %s628, 128, %s625, %s613
        $region72: #{tpu_custom_call.1} parent=47 // pred_fallthru
          _
      $region48: #{tpu_custom_call.1} parent=5 // pred_fallthru
        _
      %p631 = scmp.le.s32.totalorder 2, %s23
      // Predicated region
      $region73: #{tpu_custom_call.1} parent=5 // pred_check
        %p632 = pneg %p631
      $region74: #{tpu_custom_call.1} parent=5 // pred_check_branch
        %634 = sbr.rel (%p632) target = $region76
      $region75: #{tpu_custom_call.1} parent=5 // pred_region
        %s635 = ssub.s32 %s23, 2
        // Predicated region
        $region77: #{tpu_custom_call.1} parent=75 // pred_check
          %p636 = pneg %p232
        $region78: #{tpu_custom_call.1} parent=75 // pred_check_branch
          %638 = sbr.rel (%p636) target = $region80
        $region79: #{tpu_custom_call.1} parent=75 // pred_region
          %s639 = sand.u32 %s217, 1
          %s640 = scalar_lea.sflag [#allocation5], %s639
          %s641 = sand.u32 %s217, 1
          %s642 = smul.addr %s641, 8
          %s643 = scalar_lea.vmem [#allocation11], %s642
          %644 = dma.done %s640, 128
        $region80: #{tpu_custom_call.1} parent=75 // pred_fallthru
          _
      $region76: #{tpu_custom_call.1} parent=5 // pred_fallthru
        _
    $region6: #{tpu_custom_call.1} parent=1 // loop_footer
      %s27 = sadd.s32 1, %s23
    $region7: #{tpu_custom_call.1} parent=1 // loop_footer_branch
      %22 = sbr.rel target = $region3
    $region8: #{tpu_custom_call.1} parent=1 // loop_exit
      _
    %645 = vsyncpa [#allocation4], 1
    %s646 = scalar_lea.sflag [#allocation4], 1
    %647 = vsyncpa %s646, 1
    %648 = vsyncpa [#allocation7], 1
    %s649 = scalar_lea.sflag [#allocation7], 1
    %650 = vsyncpa %s649, 1
    %651 = vsyncpa [#allocation10], 1
    %652 = vsyncpa [#allocation5], 1
    %s653 = scalar_lea.sflag [#allocation5], 1
    %654 = vsyncpa %s653, 1

</llo_original>
